<compile_context>
chip_gen: v6e
topology: v6e:2x2x1
jax: 0.10.0
libtpu: 0.0.40
codegen_flags: <defaults>
</compile_context>

<pallas_src>
import functools
import math

import jax
import jax.numpy as jnp
from jax.experimental import pallas as pl
from jax.experimental.pallas import tpu as pltpu

C_PAD = 128          # lane-dense internal channel width
NEG_BIG = -1e30      # label-lane mask value for the log_softmax


def _fcn_fused_kernel(x_ref, w_ref, ss_ref, wcam_ref, logp_ref, cam_ref, *,
                      bt, L, kernels, pads, activation, n_labels, matmul_dtype):
    """Fully fused FCN forward for one group of `bt` batch elements.

    x_ref    : (1, bt, L, C_PAD)            f32
    w_ref    : (sum_i K_i*C_PAD, C_PAD)     bf16   all conv layers stacked, tap-major
    ss_ref   : (8, C_PAD)                   f32    row 2i = scale_i, row 2i+1 = shift_i
    wcam_ref : (C_PAD, C_PAD)               f32
    logp_ref : (1, bt, n_labels)            f32    out
    cam_ref  : (1, bt, L, n_labels)         f32    out
    """
    x = x_ref[0]                                             # (bt, L, C_PAD) f32

    off = 0
    for i, (k, pad) in enumerate(zip(kernels, pads)):        # statically unrolled layers
        # In-register 'same' halo: left = pad zeros, right = k-1-pad zeros (matches
        # PyTorch Conv1dSame incl. the even-kernel cut-last-element case).
        parts = []
        if pad > 0:
            parts.append(jnp.zeros((bt, pad, C_PAD), jnp.float32))
        parts.append(x)
        if k - 1 - pad > 0:
            parts.append(jnp.zeros((bt, k - 1 - pad, C_PAD), jnp.float32))
        xp = jnp.concatenate(parts, axis=1) if len(parts) > 1 else x   # (bt, L+k-1, C)
        # im2col: K shifted views lane-concatenated -> ONE MXU matmul over all bt*L rows.
        # (slices stay f32 so the unaligned sublane offsets avoid packed-bf16 relayouts;
        #  the single cast below is ~K*L*C_PAD elements per layer — negligible here.)
        win = jnp.concatenate([xp[:, j:j + L, :] for j in range(k)], axis=2)
        win = win.reshape(bt * L, k * C_PAD).astype(matmul_dtype)
        w = w_ref[off:off + k * C_PAD, :]                    # (k*C_PAD, C_PAD) bf16
        off += k * C_PAD
        y = jnp.dot(win, w, preferred_element_type=jnp.float32)       # (bt*L, C) f32
        # Folded conv-bias + eval-mode BatchNorm, then activation (f32 on VPU/EUP).
        y = y * ss_ref[2 * i:2 * i + 1, :] + ss_ref[2 * i + 1:2 * i + 2, :]
        if activation == "relu":
            a = jnp.maximum(y, 0.0)
        else:  # tanh
            a = jnp.tanh(y)
        x = a.reshape(bt, L, C_PAD)                          # stays f32 between layers

    # ---- Head -----------------------------------------------------------------
    # Logits in pure f32: mean_L(x) @ w_cam == mean_L(x @ w_cam) since the head is linear.
    xmean = jnp.mean(x, axis=1)                              # (bt, C_PAD) f32
    logits = jnp.dot(xmean, wcam_ref[...], preferred_element_type=jnp.float32)

    lane = jax.lax.broadcasted_iota(jnp.int32, (bt, C_PAD), 1)
    m = jnp.where(lane < n_labels, logits, NEG_BIG)
    mx = jnp.max(m, axis=1, keepdims=True)
    lse = jnp.log(jnp.sum(jnp.exp(m - mx), axis=1, keepdims=True)) + mx
    logp_ref[0] = (m - lse)[:, :n_labels].astype(logp_ref.dtype)

    # cam: bf16 matmul with f32 accumulation, stored at its REAL label width so the
    # HBM writeback is n_labels/128 the size of the old lane-padded version.
    cam = jnp.dot(x.reshape(bt * L, C_PAD).astype(matmul_dtype),
                  wcam_ref[...].astype(matmul_dtype),
                  preferred_element_type=jnp.float32)        # (bt*L, C_PAD) f32
    cam_ref[0] = cam.reshape(bt, L, C_PAD)[:, :, :n_labels].astype(cam_ref.dtype)


def _pick_batch_block(B, L, target_m=256):
    """Elements per grid step: fill MXU M (~256 rows on v6e/v7x, >=128 on v5e) while
    keeping at least 2 grid blocks so both v7x TensorCores get work."""
    bt = max(1, min(B, max(1, target_m // max(L, 1))))
    while B % bt:
        bt -= 1
    if B >= 2 and B // bt < 2:
        bt = max(1, bt // 2)
        while B % bt:
            bt -= 1
    return bt


def fcn_forward(x_ncl, block_params, w_cam, *, activation, matmul_dtype=jnp.bfloat16,
                target_m=256):
    """x_ncl: (B, C_in, L) like the PyTorch module. Returns (log_softmax(logits), cam)."""
    B, c_in0, L = x_ncl.shape
    nb = len(block_params)
    kernels = [k for (_, _, _, k) in block_params]
    # PyTorch Conv1dSame (stride=1, dilation=1): symmetric pad = ceil((k-1)/2); for even k
    # the last output is cut, i.e. keep the first L positions (done by construction).
    pads = [math.ceil((k - 1) / 2) for k in kernels]
    c_last, n_labels = w_cam.shape
    assert c_in0 <= C_PAD and c_last <= C_PAD and n_labels <= C_PAD

    bt = _pick_batch_block(B, L, target_m)
    G = B // bt

    # Channels-last, lane-padded, grouped into (G, bt, L, C_PAD).
    x = jnp.transpose(x_ncl, (0, 2, 1))                              # (B, L, C_in)
    x = jnp.pad(x, ((0, 0), (0, 0), (0, C_PAD - c_in0)))             # (B, L, C_PAD)
    x = x.reshape(G, bt, L, C_PAD)

    # Coalesce operands: one stacked conv-weight matrix + one scale/shift table.
    ss_rows = max(8, -(-(2 * nb) // 8) * 8)
    ss = jnp.zeros((ss_rows, C_PAD), jnp.float32)
    w_blocks = []
    for i, (w, scale, shift, k) in enumerate(block_params):
        K, ci, co = w.shape
        wp = jnp.zeros((K, C_PAD, C_PAD), jnp.float32).at[:, :ci, :co].set(w)
        w_blocks.append(wp.reshape(K * C_PAD, C_PAD))
        ss = ss.at[2 * i, :co].set(scale.reshape(-1))
        ss = ss.at[2 * i + 1, :co].set(shift.reshape(-1))
    w_all = jnp.concatenate(w_blocks, axis=0).astype(matmul_dtype)   # (sum_K*C_PAD, C_PAD)
    wcam_p = jnp.zeros((C_PAD, C_PAD), jnp.float32).at[:c_last, :n_labels].set(w_cam)

    kern = functools.partial(
        _fcn_fused_kernel, bt=bt, L=L, kernels=tuple(kernels), pads=tuple(pads),
        activation=activation, n_labels=n_labels, matmul_dtype=matmul_dtype)

    # Advisory cost estimate for the XLA scheduler.
    total_k = sum(kernels)
    flops = (2 * B * L * C_PAD * C_PAD * total_k        # conv layers
             + 2 * B * L * C_PAD * C_PAD                # cam matmul
             + 2 * B * C_PAD * C_PAD)                   # logits matmul
    trans = B * C_PAD + (B * L * C_PAD * nb if activation == "tanh" else 0)
    bytes_acc = (x.size * 4 + w_all.size * 2 + ss.size * 4 + wcam_p.size * 4
                 + B * n_labels * 4 + B * L * n_labels * 4)

    logp, cam = pl.pallas_call(
        kern,
        out_shape=(jax.ShapeDtypeStruct((G, bt, n_labels), jnp.float32),
                   jax.ShapeDtypeStruct((G, bt, L, n_labels), jnp.float32)),
        grid=(G,),
        in_specs=[
            pl.BlockSpec((1, bt, L, C_PAD), lambda g: (g, 0, 0, 0)),
            pl.BlockSpec(w_all.shape, lambda g: (0, 0)),      # fetched once (const index)
            pl.BlockSpec(ss.shape, lambda g: (0, 0)),
            pl.BlockSpec((C_PAD, C_PAD), lambda g: (0, 0)),
        ],
        out_specs=(
            pl.BlockSpec((1, bt, n_labels), lambda g: (g, 0, 0)),
            pl.BlockSpec((1, bt, L, n_labels), lambda g: (g, 0, 0, 0)),
        ),
        compiler_params=pltpu.CompilerParams(dimension_semantics=("parallel",)),
        cost_estimate=pl.CostEstimate(flops=int(flops), transcendentals=int(trans),
                                      bytes_accessed=int(bytes_acc)),
    )(x, w_all, ss, wcam_p)

    # Only trivial reshapes of the already-exact-size outputs remain outside the kernel.
    return logp.reshape(B, n_labels), cam.reshape(B, L, n_labels)


def _ref_forward(x_ncl, block_params, w_cam, *, activation):
    """Pure-JAX f32 reference with the same Conv1dSame / folded-BN semantics."""
    x = jnp.transpose(x_ncl, (0, 2, 1))                              # (B, L, C)
    L = x.shape[1]
    for (w, scale, shift, k) in block_params:
        pad = math.ceil((k - 1) / 2)
        xp = jnp.pad(x, ((0, 0), (pad, pad), (0, 0)))
        y = sum(jnp.einsum("blc,cd->bld", xp[:, j:j + L, :], w[j]) for j in range(k))
        y = y * scale + shift
        x = jnp.maximum(y, 0.0) if activation == "relu" else jnp.tanh(y)
    cam = jnp.einsum("blc,cd->bld", x, w_cam)
    logits = jnp.mean(cam, axis=1)
    return jax.nn.log_softmax(logits, axis=1), cam


if __name__ == "__main__":
    key = jax.random.PRNGKey(0)

    B, L = 2, 16
    channels = [4, 8, 16, 32]
    kernels = [5, 4, 3]          # includes an even kernel (cut-last-element path)
    n_labels = 6
    activation = "relu"
    eps = 1e-5                   # BatchNorm1d default eps

    key, xk = jax.random.split(key)
    x_ncl = jax.random.normal(xk, (B, channels[0], L), jnp.float32)  # PyTorch NCL input

    # Conv weight+bias, BN gamma/beta/running stats -> folded (scale, shift).
    block_params = []
    for i in range(len(channels) - 1):
        c_in, c_out, k = channels[i], channels[i + 1], kernels[i]
        key, k1, k2, k3, k4, k5 = jax.random.split(key, 6)
        w = jax.random.normal(k1, (k, c_in, c_out), jnp.float32) * 0.1   # taps: (K, C_in, C_out)
        b = jax.random.normal(k2, (c_out,), jnp.float32) * 0.1           # conv bias
        gamma = jax.random.uniform(k3, (c_out,), jnp.float32, minval=0.5, maxval=1.5)
        beta = jax.random.normal(k4, (c_out,), jnp.float32) * 0.1
        r_mean = jax.random.normal(k5, (c_out,), jnp.float32) * 0.1
        r_var = jnp.ones((c_out,), jnp.float32)
        scale = gamma / jnp.sqrt(r_var + eps)
        shift = (b - r_mean) * scale + beta
        block_params.append((w, scale.reshape(1, c_out), shift.reshape(1, c_out), k))

    key, wk = jax.random.split(key)
    # nn.Linear(C_last, n_labels, bias=False): y = x @ W.T -> stored as (C_last, n_labels)
    w_cam = jax.random.normal(wk, (channels[-1], n_labels), jnp.float32) * 0.1

    log_probs, cam = fcn_forward(x_ncl, block_params, w_cam, activation=activation)
    jax.block_until_ready((log_probs, cam))

    ref_lp, ref_cam = _ref_forward(x_ncl, block_params, w_cam, activation=activation)

    assert log_probs.shape == (B, n_labels) and log_probs.dtype == jnp.float32
    assert cam.shape == (B, L, n_labels) and cam.dtype == jnp.float32
    # log_softmax rows must exponentiate-sum to ~1 (softmax is pure f32 in-kernel).
    assert jnp.allclose(jnp.sum(jnp.exp(log_probs), axis=1), 1.0, atol=1e-5)
    # bf16 matmul operands + f32 accumulation; logits path is f32 -> tighter tolerance.
    assert jnp.allclose(log_probs, ref_lp, atol=5e-2, rtol=5e-2)
    assert jnp.allclose(cam, ref_cam, atol=5e-2, rtol=5e-2)
    print("KERNEL_OK")
</pallas_src>

<mosaic_0001>
module attributes {stable_mosaic.version = 11 : i64} {
  func.func @_fcn_fused_kernel(%arg0: i32, %arg1: memref<1x1x16x128xf32, #tpu.memory_space<vmem>>, %arg2: memref<1536x128xbf16, #tpu.memory_space<vmem>>, %arg3: memref<8x128xf32, #tpu.memory_space<vmem>>, %arg4: memref<128x128xf32, #tpu.memory_space<vmem>>, %arg5: memref<1x1x6xf32, #tpu.memory_space<vmem>>, %arg6: memref<1x1x16x6xf32, #tpu.memory_space<vmem>>) attributes {dimension_semantics = [#tpu.dimension_semantics<parallel>], iteration_bounds = array<i64: 2>, scalar_prefetch = 0 : i64, scratch_operands = 0 : i64, tpu.core_type = #tpu.core_type<tc>, window_params = [{transform_indices = @transform_0, window_bounds = array<i64: 1, 1, 16, 128>}, {pipeline_mode = #tpu.pipeline_mode<synchronous>, transform_indices = @transform_1, window_bounds = array<i64: 1536, 128>}, {pipeline_mode = #tpu.pipeline_mode<synchronous>, transform_indices = @transform_2, window_bounds = array<i64: 8, 128>}, {pipeline_mode = #tpu.pipeline_mode<synchronous>, transform_indices = @transform_3, window_bounds = array<i64: 128, 128>}, {transform_indices = @transform_4, window_bounds = array<i64: 1, 1, 6>}, {transform_indices = @transform_5, window_bounds = array<i64: 1, 1, 16, 6>}]} {
    %c0 = arith.constant 0 : index
    %c0_0 = arith.constant 0 : index
    %c0_1 = arith.constant 0 : index
    %c0_2 = arith.constant 0 : index
    %0 = vector.load %arg1[%c0, %c0_0, %c0_1, %c0_2] : memref<1x1x16x128xf32, #tpu.memory_space<vmem>>, vector<1x1x16x128xf32>
    %1 = vector.shape_cast %0 : vector<1x1x16x128xf32> to vector<1x16x128xf32>
    %cst = arith.constant 0.000000e+00 : f32
    %2 = vector.broadcast %cst : f32 to vector<1x2x128xf32>
    %cst_3 = arith.constant 0.000000e+00 : f32
    %3 = vector.broadcast %cst_3 : f32 to vector<1x2x128xf32>
    %4 = tpu.concatenate %2, %1, %3 in 1 : vector<1x2x128xf32>, vector<1x16x128xf32>, vector<1x2x128xf32> -> vector<1x20x128xf32>
    %5 = vector.extract_strided_slice %4 {offsets = [0, 0, 0], sizes = [1, 16, 128], strides = [1, 1, 1]} : vector<1x20x128xf32> to vector<1x16x128xf32>
    %6 = vector.extract_strided_slice %4 {offsets = [0, 1, 0], sizes = [1, 16, 128], strides = [1, 1, 1]} : vector<1x20x128xf32> to vector<1x16x128xf32>
    %7 = vector.extract_strided_slice %4 {offsets = [0, 2, 0], sizes = [1, 16, 128], strides = [1, 1, 1]} : vector<1x20x128xf32> to vector<1x16x128xf32>
    %8 = vector.extract_strided_slice %4 {offsets = [0, 3, 0], sizes = [1, 16, 128], strides = [1, 1, 1]} : vector<1x20x128xf32> to vector<1x16x128xf32>
    %9 = vector.extract_strided_slice %4 {offsets = [0, 4, 0], sizes = [1, 16, 128], strides = [1, 1, 1]} : vector<1x20x128xf32> to vector<1x16x128xf32>
    %10 = tpu.concatenate %5, %6, %7, %8, %9 in 2 : vector<1x16x128xf32>, vector<1x16x128xf32>, vector<1x16x128xf32>, vector<1x16x128xf32>, vector<1x16x128xf32> -> vector<1x16x640xf32>
    %11 = vector.shape_cast %10 : vector<1x16x640xf32> to vector<16x640xf32>
    %12 = arith.truncf %11 : vector<16x640xf32> to vector<16x640xbf16>
    %c0_4 = arith.constant 0 : index
    %c0_5 = arith.constant 0 : index
    %13 = vector.load %arg2[%c0_4, %c0_5] : memref<1536x128xbf16, #tpu.memory_space<vmem>>, vector<640x128xbf16>
    %cst_6 = arith.constant dense<0.000000e+00> : vector<16x128xf32>
    %14 = tpu.matmul %12, %13, %cst_6 {dimension_numbers = #tpu.dot_dimension_numbers<[1], [0], [0], [1], [0, 0, 1, 1], [], []>} : vector<16x640xbf16>, vector<640x128xbf16>, vector<16x128xf32> -> vector<16x128xf32>
    %c0_7 = arith.constant 0 : index
    %c0_8 = arith.constant 0 : index
    %15 = vector.load %arg3[%c0_7, %c0_8] : memref<8x128xf32, #tpu.memory_space<vmem>>, vector<1x128xf32>
    %16 = vector.broadcast %15 : vector<1x128xf32> to vector<16x128xf32>
    %17 = arith.mulf %14, %16 : vector<16x128xf32>
    %c1 = arith.constant 1 : index
    %c0_9 = arith.constant 0 : index
    %18 = vector.load %arg3[%c1, %c0_9] : memref<8x128xf32, #tpu.memory_space<vmem>>, vector<1x128xf32>
    %19 = vector.broadcast %18 : vector<1x128xf32> to vector<16x128xf32>
    %20 = arith.addf %17, %19 : vector<16x128xf32>
    %cst_10 = arith.constant 0.000000e+00 : f32
    %21 = vector.broadcast %cst_10 : f32 to vector<16x128xf32>
    %22 = arith.maximumf %20, %21 : vector<16x128xf32>
    %23 = vector.shape_cast %22 : vector<16x128xf32> to vector<1x16x128xf32>
    %cst_11 = arith.constant 0.000000e+00 : f32
    %24 = vector.broadcast %cst_11 : f32 to vector<1x2x128xf32>
    %cst_12 = arith.constant 0.000000e+00 : f32
    %25 = vector.broadcast %cst_12 : f32 to vector<1x1x128xf32>
    %26 = tpu.concatenate %24, %23, %25 in 1 : vector<1x2x128xf32>, vector<1x16x128xf32>, vector<1x1x128xf32> -> vector<1x19x128xf32>
    %27 = vector.extract_strided_slice %26 {offsets = [0, 0, 0], sizes = [1, 16, 128], strides = [1, 1, 1]} : vector<1x19x128xf32> to vector<1x16x128xf32>
    %28 = vector.extract_strided_slice %26 {offsets = [0, 1, 0], sizes = [1, 16, 128], strides = [1, 1, 1]} : vector<1x19x128xf32> to vector<1x16x128xf32>
    %29 = vector.extract_strided_slice %26 {offsets = [0, 2, 0], sizes = [1, 16, 128], strides = [1, 1, 1]} : vector<1x19x128xf32> to vector<1x16x128xf32>
    %30 = vector.extract_strided_slice %26 {offsets = [0, 3, 0], sizes = [1, 16, 128], strides = [1, 1, 1]} : vector<1x19x128xf32> to vector<1x16x128xf32>
    %31 = tpu.concatenate %27, %28, %29, %30 in 2 : vector<1x16x128xf32>, vector<1x16x128xf32>, vector<1x16x128xf32>, vector<1x16x128xf32> -> vector<1x16x512xf32>
    %32 = vector.shape_cast %31 : vector<1x16x512xf32> to vector<16x512xf32>
    %33 = arith.truncf %32 : vector<16x512xf32> to vector<16x512xbf16>
    %c640 = arith.constant 640 : index
    %c0_13 = arith.constant 0 : index
    %34 = vector.load %arg2[%c640, %c0_13] : memref<1536x128xbf16, #tpu.memory_space<vmem>>, vector<512x128xbf16>
    %cst_14 = arith.constant dense<0.000000e+00> : vector<16x128xf32>
    %35 = tpu.matmul %33, %34, %cst_14 {dimension_numbers = #tpu.dot_dimension_numbers<[1], [0], [0], [1], [0, 0, 1, 1], [], []>} : vector<16x512xbf16>, vector<512x128xbf16>, vector<16x128xf32> -> vector<16x128xf32>
    %c2 = arith.constant 2 : index
    %c0_15 = arith.constant 0 : index
    %36 = vector.load %arg3[%c2, %c0_15] : memref<8x128xf32, #tpu.memory_space<vmem>>, vector<1x128xf32>
    %37 = vector.broadcast %36 : vector<1x128xf32> to vector<16x128xf32>
    %38 = arith.mulf %35, %37 : vector<16x128xf32>
    %c3 = arith.constant 3 : index
    %c0_16 = arith.constant 0 : index
    %39 = vector.load %arg3[%c3, %c0_16] : memref<8x128xf32, #tpu.memory_space<vmem>>, vector<1x128xf32>
    %40 = vector.broadcast %39 : vector<1x128xf32> to vector<16x128xf32>
    %41 = arith.addf %38, %40 : vector<16x128xf32>
    %cst_17 = arith.constant 0.000000e+00 : f32
    %42 = vector.broadcast %cst_17 : f32 to vector<16x128xf32>
    %43 = arith.maximumf %41, %42 : vector<16x128xf32>
    %44 = vector.shape_cast %43 : vector<16x128xf32> to vector<1x16x128xf32>
    %cst_18 = arith.constant 0.000000e+00 : f32
    %45 = vector.broadcast %cst_18 : f32 to vector<1x1x128xf32>
    %cst_19 = arith.constant 0.000000e+00 : f32
    %46 = vector.broadcast %cst_19 : f32 to vector<1x1x128xf32>
    %47 = tpu.concatenate %45, %44, %46 in 1 : vector<1x1x128xf32>, vector<1x16x128xf32>, vector<1x1x128xf32> -> vector<1x18x128xf32>
    %48 = vector.extract_strided_slice %47 {offsets = [0, 0, 0], sizes = [1, 16, 128], strides = [1, 1, 1]} : vector<1x18x128xf32> to vector<1x16x128xf32>
    %49 = vector.extract_strided_slice %47 {offsets = [0, 1, 0], sizes = [1, 16, 128], strides = [1, 1, 1]} : vector<1x18x128xf32> to vector<1x16x128xf32>
    %50 = vector.extract_strided_slice %47 {offsets = [0, 2, 0], sizes = [1, 16, 128], strides = [1, 1, 1]} : vector<1x18x128xf32> to vector<1x16x128xf32>
    %51 = tpu.concatenate %48, %49, %50 in 2 : vector<1x16x128xf32>, vector<1x16x128xf32>, vector<1x16x128xf32> -> vector<1x16x384xf32>
    %52 = vector.shape_cast %51 : vector<1x16x384xf32> to vector<16x384xf32>
    %53 = arith.truncf %52 : vector<16x384xf32> to vector<16x384xbf16>
    %c1152 = arith.constant 1152 : index
    %c0_20 = arith.constant 0 : index
    %54 = vector.load %arg2[%c1152, %c0_20] : memref<1536x128xbf16, #tpu.memory_space<vmem>>, vector<384x128xbf16>
    %cst_21 = arith.constant dense<0.000000e+00> : vector<16x128xf32>
    %55 = tpu.matmul %53, %54, %cst_21 {dimension_numbers = #tpu.dot_dimension_numbers<[1], [0], [0], [1], [0, 0, 1, 1], [], []>} : vector<16x384xbf16>, vector<384x128xbf16>, vector<16x128xf32> -> vector<16x128xf32>
    %c4 = arith.constant 4 : index
    %c0_22 = arith.constant 0 : index
    %56 = vector.load %arg3[%c4, %c0_22] : memref<8x128xf32, #tpu.memory_space<vmem>>, vector<1x128xf32>
    %57 = vector.broadcast %56 : vector<1x128xf32> to vector<16x128xf32>
    %58 = arith.mulf %55, %57 : vector<16x128xf32>
    %c5 = arith.constant 5 : index
    %c0_23 = arith.constant 0 : index
    %59 = vector.load %arg3[%c5, %c0_23] : memref<8x128xf32, #tpu.memory_space<vmem>>, vector<1x128xf32>
    %60 = vector.broadcast %59 : vector<1x128xf32> to vector<16x128xf32>
    %61 = arith.addf %58, %60 : vector<16x128xf32>
    %cst_24 = arith.constant 0.000000e+00 : f32
    %62 = vector.broadcast %cst_24 : f32 to vector<16x128xf32>
    %63 = arith.maximumf %61, %62 : vector<16x128xf32>
    %64 = vector.shape_cast %63 : vector<16x128xf32> to vector<1x16x128xf32>
    %cst_25 = arith.constant dense<0.000000e+00> : vector<1x128xf32>
    %65 = vector.multi_reduction <add>, %64, %cst_25 [1] : vector<1x16x128xf32> to vector<1x128xf32>
    %cst_26 = arith.constant 1.600000e+01 : f32
    %66 = vector.broadcast %cst_26 : f32 to vector<1x128xf32>
    %67 = arith.divf %65, %66 : vector<1x128xf32>
    %c0_27 = arith.constant 0 : index
    %c0_28 = arith.constant 0 : index
    %68 = vector.load %arg4[%c0_27, %c0_28] : memref<128x128xf32, #tpu.memory_space<vmem>>, vector<128x128xf32>
    %cst_29 = arith.constant dense<0.000000e+00> : vector<1x128xf32>
    %69 = tpu.matmul %67, %68, %cst_29 {dimension_numbers = #tpu.dot_dimension_numbers<[1], [0], [0], [1], [0, 0, 1, 1], [], []>} : vector<1x128xf32>, vector<128x128xf32>, vector<1x128xf32> -> vector<1x128xf32>
    %70 = tpu.iota {dimensions = array<i32: 1>} : vector<1x128xi32>
    %c6_i32 = arith.constant 6 : i32
    %71 = vector.broadcast %c6_i32 : i32 to vector<1x128xi32>
    %72 = arith.cmpi slt, %70, %71 : vector<1x128xi32>
    %cst_30 = arith.constant -1.000000e+30 : f32
    %73 = vector.broadcast %cst_30 : f32 to vector<1x128xf32>
    %74 = arith.select %72, %69, %73 : vector<1x128xi1>, vector<1x128xf32>
    %cst_31 = arith.constant dense<0xFF800000> : vector<1xf32>
    %75 = vector.multi_reduction <maximumf>, %74, %cst_31 [1] : vector<1x128xf32> to vector<1xf32>
    %76 = vector.shape_cast %75 : vector<1xf32> to vector<1x1xf32>
    %77 = vector.broadcast %76 : vector<1x1xf32> to vector<1x128xf32>
    %78 = arith.subf %74, %77 : vector<1x128xf32>
    %79 = math.exp %78 : vector<1x128xf32>
    %cst_32 = arith.constant dense<0.000000e+00> : vector<1xf32>
    %80 = vector.multi_reduction <add>, %79, %cst_32 [1] : vector<1x128xf32> to vector<1xf32>
    %81 = vector.shape_cast %80 : vector<1xf32> to vector<1x1xf32>
    %82 = math.log %81 : vector<1x1xf32>
    %83 = arith.addf %82, %76 : vector<1x1xf32>
    %84 = vector.broadcast %83 : vector<1x1xf32> to vector<1x128xf32>
    %85 = arith.subf %74, %84 : vector<1x128xf32>
    %86 = vector.extract_strided_slice %85 {offsets = [0, 0], sizes = [1, 6], strides = [1, 1]} : vector<1x128xf32> to vector<1x6xf32>
    %c0_33 = arith.constant 0 : index
    %c0_34 = arith.constant 0 : index
    %c0_35 = arith.constant 0 : index
    %87 = vector.load %arg5[%c0_33, %c0_34, %c0_35] : memref<1x1x6xf32, #tpu.memory_space<vmem>>, vector<1x1x6xf32>
    %88 = vector.shape_cast %87 : vector<1x1x6xf32> to vector<1x6xf32>
    %89 = vector.shape_cast %86 : vector<1x6xf32> to vector<1x1x6xf32>
    tpu.vector_store %arg5[%c0_33, %c0_34, %c0_35], %89 {strides = array<i32>} : memref<1x1x6xf32, #tpu.memory_space<vmem>>, vector<1x1x6xf32>,
    %90 = vector.shape_cast %64 : vector<1x16x128xf32> to vector<16x128xf32>
    %91 = arith.truncf %90 : vector<16x128xf32> to vector<16x128xbf16>
    %c0_36 = arith.constant 0 : index
    %c0_37 = arith.constant 0 : index
    %92 = vector.load %arg4[%c0_36, %c0_37] : memref<128x128xf32, #tpu.memory_space<vmem>>, vector<128x128xf32>
    %93 = arith.truncf %92 : vector<128x128xf32> to vector<128x128xbf16>
    %cst_38 = arith.constant dense<0.000000e+00> : vector<16x128xf32>
    %94 = tpu.matmul %91, %93, %cst_38 {dimension_numbers = #tpu.dot_dimension_numbers<[1], [0], [0], [1], [0, 0, 1, 1], [], []>} : vector<16x128xbf16>, vector<128x128xbf16>, vector<16x128xf32> -> vector<16x128xf32>
    %95 = vector.shape_cast %94 : vector<16x128xf32> to vector<1x16x128xf32>
    %96 = vector.extract_strided_slice %95 {offsets = [0, 0, 0], sizes = [1, 16, 6], strides = [1, 1, 1]} : vector<1x16x128xf32> to vector<1x16x6xf32>
    %c0_39 = arith.constant 0 : index
    %c0_40 = arith.constant 0 : index
    %c0_41 = arith.constant 0 : index
    %c0_42 = arith.constant 0 : index
    %97 = vector.load %arg6[%c0_39, %c0_40, %c0_41, %c0_42] : memref<1x1x16x6xf32, #tpu.memory_space<vmem>>, vector<1x1x16x6xf32>
    %98 = vector.shape_cast %97 : vector<1x1x16x6xf32> to vector<1x16x6xf32>
    %99 = vector.shape_cast %96 : vector<1x16x6xf32> to vector<1x1x16x6xf32>
    tpu.vector_store %arg6[%c0_39, %c0_40, %c0_41, %c0_42], %99 {strides = array<i32>} : memref<1x1x16x6xf32, #tpu.memory_space<vmem>>, vector<1x1x16x6xf32>,
    return
  }
  func.func @transform_0(%arg0: i32) -> (i32, i32, i32, i32) {
    %c0_i32 = arith.constant 0 : i32
    %c0_i32_0 = arith.constant 0 : i32
    %c0_i32_1 = arith.constant 0 : i32
    %c0_i32_2 = arith.constant 0 : i32
    return %arg0, %c0_i32, %c0_i32_0, %c0_i32_1 : i32, i32, i32, i32
  }
  func.func @transform_1(%arg0: i32) -> (i32, i32) {
    %c0_i32 = arith.constant 0 : i32
    %c0_i32_0 = arith.constant 0 : i32
    %c0_i32_1 = arith.constant 0 : i32
    return %c0_i32, %c0_i32_0 : i32, i32
  }
  func.func @transform_2(%arg0: i32) -> (i32, i32) {
    %c0_i32 = arith.constant 0 : i32
    %c0_i32_0 = arith.constant 0 : i32
    %c0_i32_1 = arith.constant 0 : i32
    return %c0_i32, %c0_i32_0 : i32, i32
  }
  func.func @transform_3(%arg0: i32) -> (i32, i32) {
    %c0_i32 = arith.constant 0 : i32
    %c0_i32_0 = arith.constant 0 : i32
    %c0_i32_1 = arith.constant 0 : i32
    return %c0_i32, %c0_i32_0 : i32, i32
  }
  func.func @transform_4(%arg0: i32) -> (i32, i32, i32) {
    %c0_i32 = arith.constant 0 : i32
    %c0_i32_0 = arith.constant 0 : i32
    %c0_i32_1 = arith.constant 0 : i32
    return %arg0, %c0_i32, %c0_i32_0 : i32, i32, i32
  }
  func.func @transform_5(%arg0: i32) -> (i32, i32, i32, i32) {
    %c0_i32 = arith.constant 0 : i32
    %c0_i32_0 = arith.constant 0 : i32
    %c0_i32_1 = arith.constant 0 : i32
    %c0_i32_2 = arith.constant 0 : i32
    return %arg0, %c0_i32, %c0_i32_0, %c0_i32_1 : i32, i32, i32, i32
  }
}

</mosaic_0001>

<llo_original>
// kernel: tpu_custom_call.1
$region0: #{tpu_custom_call.1}
  #allocation0 [shape = 'u32[]', space=smem, size = 0x4, offset = 0x4, fixed_abs, tag = 'smem constant byte address 0x4 - core index']
  #allocation1 [shape = 'u32[144,128]{1,0:T(1,128)}', space=vmem, size = 0x12000, scoped, tag = 'internal scratch']
  %s0 = inlined_call_operand.hbm [shape: f32[2,1,16,128], index: 0, kind: input, shape index: {}]
  %s1 = inlined_call_operand.hbm [shape: bf16[1536,128], index: 1, kind: input, shape index: {}]
  %s2 = inlined_call_operand.hbm [shape: f32[8,128], index: 2, kind: input, shape index: {}]
  %s3 = inlined_call_operand.hbm [shape: f32[128,128], index: 3, kind: input, shape index: {}]
  %s4 = inlined_call_operand.hbm [shape: f32[2,1,6], index: 4, kind: output, shape index: {0}]
  %s5 = inlined_call_operand.vmem [shape: f32[2,1,16,6], index: 5, kind: output, shape index: {1}]
  %6 = xla_tuple %s4, %s5
  %s7 = sld [smem:[#allocation0]]
  $region73: #{tpu_custom_call.1} parent=0
    _
  %s9 = ssub.s32 1, %s7
  %s10 = scalar_select 0, %s9, %s7
  $region1: #{tpu_custom_call.1} parent=0
    #allocation2 [shape = 'u8[16384]{0}', space=vmem, size = 0x4000, scoped, tag = 'input window, operand 0']
    #allocation3 [shape = 's32[2]{0}', space=sflag, size = 0x8, scoped, tag = 'scoped memory for tpu_custom_call.1']
    #allocation4 [shape = 's32[2]{0}', space=sflag, size = 0x8, scoped, tag = 'scoped memory for tpu_custom_call.1']
    #allocation5 [shape = 'u8[393216]{0}', space=vmem, size = 0x60000, scoped, tag = 'input window, operand 1, single buffered']
    #allocation6 [shape = 's32[1]{0}', space=sflag, size = 0x4, scoped, tag = 'scoped memory for tpu_custom_call.1']
    #allocation7 [shape = 'u8[4096]{0}', space=vmem, size = 0x1000, scoped, tag = 'input window, operand 2, single buffered']
    #allocation8 [shape = 'u8[65536]{0}', space=vmem, size = 0x10000, scoped, tag = 'input window, operand 3, single buffered']
    #allocation9 [shape = 's32[1]{0}', space=sflag, size = 0x4, scoped, tag = 'scoped memory for tpu_custom_call.1']
    #allocation10 [shape = 'u8[1024]{0}', space=vmem, size = 0x400, scoped, tag = 'output window, operand 0']
    %11 = vsyncpa [#allocation3], 0
    %s12 = scalar_lea.sflag [#allocation3], 1
    %13 = vsyncpa %s12, 0
    %14 = vsyncpa [#allocation6], 0
    %15 = vsyncpa [#allocation9], 0
    %16 = vsyncpa [#allocation4], 0
    %s17 = scalar_lea.sflag [#allocation4], 1
    %18 = vsyncpa %s17, 0
    loop: start=0, step=1, limit=4
    $region2: #{tpu_custom_call.1} parent=1 // loop_pre_header
      _
    $region3: #{tpu_custom_call.1} parent=1 // loop_header
      %s20 = sphi 0, %s24
      %p21 = scmp.ge.s32.totalorder %s20, 4
      %s30 = sphi 0, %s32
      %s33 = sphi 0, %s30
      %s34 = sphi 0, %s33
      %s50 = sphi 0, %s34
      %s54 = sphi 0, %s54
      %s56 = sphi 0, %s54
      %s57 = sphi 0, %s56
      %s71 = sphi 0, %s57
      %s75 = sphi 0, %s75
      %s77 = sphi 0, %s75
      %s78 = sphi 0, %s77
      %s92 = sphi 0, %s78
      %s96 = sphi 0, %s96
      %s98 = sphi 0, %s96
      %s99 = sphi 0, %s98
      %s113 = sphi 0, %s99
      %s119 = sphi 0, %s121
      %s122 = sphi 0, %s119
      %s123 = sphi 0, %s122
      %s139 = sphi 0, %s123
      %s145 = sphi 0, %s147
      %s148 = sphi 0, %s145
      %s149 = sphi 0, %s148
      %s165 = sphi 0, %s149
    $region4: #{tpu_custom_call.1} parent=1 // loop_header_branch
      %23 = sbr.rel (%p21) target = $region8
    $region5: #{tpu_custom_call.1} parent=1 // loop_body
      %s25 = ssub.s32 %s20, 1
      %s26 = ssub.s32 %s20, 2
      %s27 = sadd.s32 %s20, 1
      %s28 = ssub.s32 %s20, %s27
      %p29 = scmp.eq.s32.totalorder %s28, 0
      %s31 = sadd.s32 %s30, 1
      %s32 = scalar_select %p29, %s30, %s31
      %p35 = pneg %p29
      %p36 = scmp.eq.s32.totalorder %s20, 1
      %p37 = por %p35, %p36
      %p38 = scmp.ne.s32.totalorder %s30, %s33
      %p39 = scmp.eq.s32.totalorder %s20, 0
      %p40 = por %p38, %p39
      %p41 = scmp.ne.s32.totalorder %s30, %s33
      %p42 = scmp.eq.s32.totalorder %s25, 1
      %p43 = por %p41, %p42
      %p44 = scmp.ne.s32.totalorder %s33, %s34
      %p45 = scmp.eq.s32.totalorder %s25, 0
      %p46 = por %p44, %p45
      %p47 = scmp.ne.s32.totalorder %s33, %s34
      %p48 = scmp.eq.s32.totalorder %s26, 1
      %p49 = por %p47, %p48
      %p51 = scmp.ne.s32.totalorder %s34, %s50
      %p52 = scmp.eq.s32.totalorder %s26, 0
      %p53 = por %p51, %p52
      %s55 = sadd.s32 %s54, 1
      %p58 = scmp.eq.s32.totalorder %s20, 1
      %p59 = scmp.ne.s32.totalorder %s54, %s56
      %p60 = scmp.eq.s32.totalorder %s20, 0
      %p61 = por %p59, %p60
      %p62 = scmp.ne.s32.totalorder %s54, %s56
      %p63 = scmp.eq.s32.totalorder %s25, 1
      %p64 = por %p62, %p63
      %p65 = scmp.ne.s32.totalorder %s56, %s57
      %p66 = scmp.eq.s32.totalorder %s25, 0
      %p67 = por %p65, %p66
      %p68 = scmp.ne.s32.totalorder %s56, %s57
      %p69 = scmp.eq.s32.totalorder %s26, 1
      %p70 = por %p68, %p69
      %p72 = scmp.ne.s32.totalorder %s57, %s71
      %p73 = scmp.eq.s32.totalorder %s26, 0
      %p74 = por %p72, %p73
      %s76 = sadd.s32 %s75, 1
      %p79 = scmp.eq.s32.totalorder %s20, 1
      %p80 = scmp.ne.s32.totalorder %s75, %s77
      %p81 = scmp.eq.s32.totalorder %s20, 0
      %p82 = por %p80, %p81
      %p83 = scmp.ne.s32.totalorder %s75, %s77
      %p84 = scmp.eq.s32.totalorder %s25, 1
      %p85 = por %p83, %p84
      %p86 = scmp.ne.s32.totalorder %s77, %s78
      %p87 = scmp.eq.s32.totalorder %s25, 0
      %p88 = por %p86, %p87
      %p89 = scmp.ne.s32.totalorder %s77, %s78
      %p90 = scmp.eq.s32.totalorder %s26, 1
      %p91 = por %p89, %p90
      %p93 = scmp.ne.s32.totalorder %s78, %s92
      %p94 = scmp.eq.s32.totalorder %s26, 0
      %p95 = por %p93, %p94
      %s97 = sadd.s32 %s96, 1
      %p100 = scmp.eq.s32.totalorder %s20, 1
      %p101 = scmp.ne.s32.totalorder %s96, %s98
      %p102 = scmp.eq.s32.totalorder %s20, 0
      %p103 = por %p101, %p102
      %p104 = scmp.ne.s32.totalorder %s96, %s98
      %p105 = scmp.eq.s32.totalorder %s25, 1
      %p106 = por %p104, %p105
      %p107 = scmp.ne.s32.totalorder %s98, %s99
      %p108 = scmp.eq.s32.totalorder %s25, 0
      %p109 = por %p107, %p108
      %p110 = scmp.ne.s32.totalorder %s98, %s99
      %p111 = scmp.eq.s32.totalorder %s26, 1
      %p112 = por %p110, %p111
      %p114 = scmp.ne.s32.totalorder %s99, %s113
      %p115 = scmp.eq.s32.totalorder %s26, 0
      %p116 = por %p114, %p115
      %s117 = ssub.s32 %s20, %s27
      %p118 = scmp.eq.s32.totalorder %s117, 0
      %s120 = sadd.s32 %s119, 1
      %s121 = scalar_select %p118, %s119, %s120
      %p124 = pneg %p118
      %p125 = scmp.eq.s32.totalorder %s20, 1
      %p126 = por %p124, %p125
      %p127 = scmp.ne.s32.totalorder %s119, %s122
      %p128 = scmp.eq.s32.totalorder %s20, 0
      %p129 = por %p127, %p128
      %p130 = scmp.ne.s32.totalorder %s119, %s122
      %p131 = scmp.eq.s32.totalorder %s25, 1
      %p132 = por %p130, %p131
      %p133 = scmp.ne.s32.totalorder %s122, %s123
      %p134 = scmp.eq.s32.totalorder %s25, 0
      %p135 = por %p133, %p134
      %p136 = scmp.ne.s32.totalorder %s122, %s123
      %p137 = scmp.eq.s32.totalorder %s26, 1
      %p138 = por %p136, %p137
      %p140 = scmp.ne.s32.totalorder %s123, %s139
      %p141 = scmp.eq.s32.totalorder %s26, 0
      %p142 = por %p140, %p141
      %s143 = ssub.s32 %s20, %s27
      %p144 = scmp.eq.s32.totalorder %s143, 0
      %s146 = sadd.s32 %s145, 1
      %s147 = scalar_select %p144, %s145, %s146
      %p150 = pneg %p144
      %p151 = scmp.eq.s32.totalorder %s20, 1
      %p152 = por %p150, %p151
      %p153 = scmp.ne.s32.totalorder %s145, %s148
      %p154 = scmp.eq.s32.totalorder %s20, 0
      %p155 = por %p153, %p154
      %p156 = scmp.ne.s32.totalorder %s145, %s148
      %p157 = scmp.eq.s32.totalorder %s25, 1
      %p158 = por %p156, %p157
      %p159 = scmp.ne.s32.totalorder %s148, %s149
      %p160 = scmp.eq.s32.totalorder %s25, 0
      %p161 = por %p159, %p160
      %p162 = scmp.ne.s32.totalorder %s148, %s149
      %p163 = scmp.eq.s32.totalorder %s26, 1
      %p164 = por %p162, %p163
      %p166 = scmp.ne.s32.totalorder %s149, %s165
      %p167 = scmp.eq.s32.totalorder %s26, 0
      %p168 = por %p166, %p167
      %p169 = scmp.le.s32.totalorder 1, %s20
      %p170 = scmp.lt.s32.totalorder %s20, 3
      %p171 = pnand %p169, %p170
      %p172 = pneg %p171
      // Predicated region
      $region9: #{tpu_custom_call.1} parent=5 // pred_check
        _
      $region10: #{tpu_custom_call.1} parent=5 // pred_check_branch
        %174 = sbr.rel (%p171) target = $region12
      $region11: #{tpu_custom_call.1} parent=5 // pred_region
        %s175 = ssub.s32 %s20, 1
        // Predicated region
        $region13: #{tpu_custom_call.1} parent=11 // pred_check
          %p176 = pneg %p67
        $region14: #{tpu_custom_call.1} parent=11 // pred_check_branch
          %178 = sbr.rel (%p176) target = $region16
        $region15: #{tpu_custom_call.1} parent=11 // pred_region
          %s180 = ssub.s32 12288, 12288
          %181 = vsyncadd [#allocation6], %s180
          %s182 = sshll.u32 [#allocation5], 4
          %s183 = int_to_ptr.vmem [resolvable:$true] %s182
          %188 = dma.hbm_to_vmem [thread:$0]  %s1, 12288, %s183, [#allocation6], 64, 64, 4
        $region16: #{tpu_custom_call.1} parent=11 // pred_fallthru
          _
        // Predicated region
        $region17: #{tpu_custom_call.1} parent=11 // pred_check
          %p189 = pneg %p88
        $region18: #{tpu_custom_call.1} parent=11 // pred_check_branch
          %191 = sbr.rel (%p189) target = $region20
        $region19: #{tpu_custom_call.1} parent=11 // pred_region
          %s193 = ssub.s32 128, 128
          %194 = vsyncadd [#allocation6], %s193
          %s196 = sshll.u32 [#allocation7], 4
          %s197 = int_to_ptr.vmem [resolvable:$true] %s196
          %199 = dma.hbm_to_vmem [thread:$0]  %s2, 128, %s197, [#allocation6]
        $region20: #{tpu_custom_call.1} parent=11 // pred_fallthru
          _
        // Predicated region
        $region21: #{tpu_custom_call.1} parent=11 // pred_check
          %p200 = pneg %p109
        $region22: #{tpu_custom_call.1} parent=11 // pred_check_branch
          %202 = sbr.rel (%p200) target = $region24
        $region23: #{tpu_custom_call.1} parent=11 // pred_region
          %s204 = ssub.s32 2048, 2048
          %205 = vsyncadd [#allocation9], %s204
          %s206 = sshll.u32 [#allocation8], 4
          %s207 = int_to_ptr.vmem [resolvable:$true] %s206
          %212 = dma.hbm_to_vmem [thread:$0]  %s3, 2048, %s207, [#allocation9], 128, 128, 8
        $region24: #{tpu_custom_call.1} parent=11 // pred_fallthru
          _
      $region12: #{tpu_custom_call.1} parent=5 // pred_fallthru
        _
      %p213 = scmp.lt.s32.totalorder %s20, 2
      // Predicated region
      $region25: #{tpu_custom_call.1} parent=5 // pred_check
        %p214 = pneg %p213
      $region26: #{tpu_custom_call.1} parent=5 // pred_check_branch
        %216 = sbr.rel (%p214) target = $region28
      $region27: #{tpu_custom_call.1} parent=5 // pred_region
        // Predicated region
        $region29: #{tpu_custom_call.1} parent=27 // pred_check
          %p217 = pneg %p40
        $region30: #{tpu_custom_call.1} parent=27 // pred_check_branch
          %219 = sbr.rel (%p217) target = $region32
        $region31: #{tpu_custom_call.1} parent=27 // pred_region
          %s220 = sand.u32 %s30, 1
          %s221 = scalar_lea.sflag [#allocation3], %s220
          %s222 = sand.u32 %s30, 1
          %s223 = smul.addr %s222, 16
          %s224 = scalar_lea.vmem [#allocation2], %s223
          %s226 = ssub.s32 256, 256
          %227 = vsyncadd %s221, %s226
          %s228 = smul.addr %s20, 2
          %s229 = smul.addr %s228, 128
          %s230 = scalar_lea.hbm %s0, %s229
          %s231 = sshll.u32 %s224, 4
          %s232 = int_to_ptr.vmem [resolvable:$true] %s231
          %237 = dma.hbm_to_vmem [thread:$0]  %s230, 256, %s232, %s221, 128, 128, 8
        $region32: #{tpu_custom_call.1} parent=27 // pred_fallthru
          _
      $region28: #{tpu_custom_call.1} parent=5 // pred_fallthru
        _
      %p238 = scmp.le.s32.totalorder 1, %s20
      %p239 = scmp.lt.s32.totalorder %s20, 3
      %p240 = pnand %p238, %p239
      %p241 = pneg %p240
      // Predicated region
      $region33: #{tpu_custom_call.1} parent=5 // pred_check
        _
      $region34: #{tpu_custom_call.1} parent=5 // pred_check_branch
        %243 = sbr.rel (%p240) target = $region36
      $region35: #{tpu_custom_call.1} parent=5 // pred_region
        %s244 = ssub.s32 %s20, 1
        %s245 = sand.u32 %s33, 1
        %s246 = scalar_lea.sflag [#allocation3], %s245
        %s247 = sand.u32 %s33, 1
        %s248 = smul.addr %s247, 16
        %s249 = scalar_lea.vmem [#allocation2], %s248
        // Predicated region
        $region37: #{tpu_custom_call.1} parent=35 // pred_check
          %p250 = pneg %p46
        $region38: #{tpu_custom_call.1} parent=35 // pred_check_branch
          %252 = sbr.rel (%p250) target = $region40
        $region39: #{tpu_custom_call.1} parent=35 // pred_region
          %253 = dma.done %s246, 256
        $region40: #{tpu_custom_call.1} parent=35 // pred_fallthru
          _
        // Predicated region
        $region41: #{tpu_custom_call.1} parent=35 // pred_check
          %p254 = pneg %p67
        $region42: #{tpu_custom_call.1} parent=35 // pred_check_branch
          %256 = sbr.rel (%p254) target = $region44
        $region43: #{tpu_custom_call.1} parent=35 // pred_region
          %257 = dma.done [#allocation6], 12288
        $region44: #{tpu_custom_call.1} parent=35 // pred_fallthru
          _
        // Predicated region
        $region45: #{tpu_custom_call.1} parent=35 // pred_check
          %p258 = pneg %p88
        $region46: #{tpu_custom_call.1} parent=35 // pred_check_branch
          %260 = sbr.rel (%p258) target = $region48
        $region47: #{tpu_custom_call.1} parent=35 // pred_region
          %261 = dma.done [#allocation6], 128
        $region48: #{tpu_custom_call.1} parent=35 // pred_fallthru
          _
        // Predicated region
        $region49: #{tpu_custom_call.1} parent=35 // pred_check
          %p262 = pneg %p109
        $region50: #{tpu_custom_call.1} parent=35 // pred_check_branch
          %264 = sbr.rel (%p262) target = $region52
        $region51: #{tpu_custom_call.1} parent=35 // pred_region
          %265 = dma.done [#allocation9], 2048
        $region52: #{tpu_custom_call.1} parent=35 // pred_fallthru
          _
        %s266 = sand.u32 %s33, 1
        %s267 = scalar_lea.sflag [#allocation3], %s266
        %s268 = sand.u32 %s33, 1
        %s269 = smul.addr %s268, 16
        %s270 = scalar_lea.vmem [#allocation2], %s269
        %p271 = pneg %p46
        %p272 = pneg %p43
        %p273 = pneg %p67
        %p274 = pneg %p64
        %p275 = pneg %p88
        %p276 = pneg %p85
        %p277 = pneg %p109
        %p278 = pneg %p106
        %p279 = pneg %p135
        %p280 = pneg %p132
        %s281 = sand.u32 %s122, 1
        %s282 = scalar_lea.sflag [#allocation4], %s281
        %s283 = sand.u32 %s122, 1
        %s284 = scalar_lea.vmem [#allocation10], %s283
        %p285 = pneg %p161
        %p286 = pneg %p158
        %p287 = scmp.lt.s32.totalorder %s25, 1
        %s288 = scalar_select %p287, %s25, 1
        %s289 = smul.addr %s288, 2
        %s290 = smul.addr %s289, 8
        %s291 = scalar_lea.vmem %s5, %s290
        %p292 = scmp.lt.s32.totalorder %s25, 1
        %s293 = scalar_select %p292, %s25, 1
        %s294 = smul.addr %s293, 2
        %s295 = smul.addr %s294, 8
        %s296 = scalar_lea.vmem %s5, %s295
        %v298 = vld [vmem:[%s249] sm:$0xff]
        %v299 = vld [vmem:[%s249 + $0x8] sm:$0xff]
        %vm302 = vcmask 1041408
        %v303 = vrot.slane %v298, 6
        %v304 = vrot.slane %v299, 6
        %v305 = vsel %vm302, %v303, %v304
        %v309 = vsel %vm302, 0.0, %v303
        %v310 = vsel %vm302, %v304, 0.0
        %vm313 = vcmask 1046528
        %v314 = vrot.slane %v309, 1
        %v315 = vrot.slane %v305, 1
        %v316 = vsel %vm313, %v314, %v315
        %v317 = vrot.slane %v310, 1
        %v318 = vsel %vm313, %v315, %v317
        %vm321 = vcmask 1045504
        %v322 = vrot.slane %v309, 2
        %v323 = vrot.slane %v305, 2
        %v324 = vsel %vm321, %v322, %v323
        %v325 = vrot.slane %v310, 2
        %v326 = vsel %vm321, %v323, %v325
        %vm329 = vcmask 1044480
        %v330 = vrot.slane %v309, 3
        %v331 = vrot.slane %v305, 3
        %v332 = vsel %vm329, %v330, %v331
        %v333 = vrot.slane %v310, 3
        %v334 = vsel %vm329, %v331, %v333
        %vm337 = vcmask 1043456
        %v338 = vrot.slane %v309, 4
        %v339 = vrot.slane %v305, 4
        %v340 = vsel %vm337, %v338, %v339
        %v341 = vrot.slane %v310, 4
        %v342 = vsel %vm337, %v339, %v341
        %v345 = vpack.c.bf16 %v305, %v309
        %v346 = vpack.c.bf16 %v318, %v316
        %v347 = vpack.c.bf16 %v326, %v324
        %v348 = vpack.c.bf16 %v334, %v332
        %v349 = vpack.c.bf16 %v342, %v340
        %v350 = vld [vmem:[#allocation5] sm:$0xf]
        %v351 = vld [vmem:[#allocation5 + $0x4] sm:$0xf]
        %v352 = vld [vmem:[#allocation5 + $0x8] sm:$0xf]
        %v353 = vld [vmem:[#allocation5 + $0xc] sm:$0xf]
        %v354 = vld [vmem:[#allocation5 + $0x10] sm:$0xf]
        %v355 = vld [vmem:[#allocation5 + $0x14] sm:$0xf]
        %v356 = vld [vmem:[#allocation5 + $0x18] sm:$0xf]
        %v357 = vld [vmem:[#allocation5 + $0x1c] sm:$0xf]
        %v358 = vld [vmem:[#allocation5 + $0x20] sm:$0xf]
        %v359 = vld [vmem:[#allocation5 + $0x24] sm:$0xf]
        %v360 = vld [vmem:[#allocation5 + $0x28] sm:$0xf]
        %v361 = vld [vmem:[#allocation5 + $0x2c] sm:$0xf]
        %v362 = vld [vmem:[#allocation5 + $0x30] sm:$0xf]
        %v363 = vld [vmem:[#allocation5 + $0x34] sm:$0xf]
        %v364 = vld [vmem:[#allocation5 + $0x38] sm:$0xf]
        %v365 = vld [vmem:[#allocation5 + $0x3c] sm:$0xf]
        %v366 = vld [vmem:[#allocation5 + $0x40] sm:$0xf]
        %v367 = vld [vmem:[#allocation5 + $0x44] sm:$0xf]
        %v368 = vld [vmem:[#allocation5 + $0x48] sm:$0xf]
        %v369 = vld [vmem:[#allocation5 + $0x4c] sm:$0xf]
        %v370 = vld [vmem:[#allocation5 + $0x50] sm:$0xf]
        %v371 = vld [vmem:[#allocation5 + $0x54] sm:$0xf]
        %v372 = vld [vmem:[#allocation5 + $0x58] sm:$0xf]
        %v373 = vld [vmem:[#allocation5 + $0x5c] sm:$0xf]
        %v374 = vld [vmem:[#allocation5 + $0x60] sm:$0xf]
        %v375 = vld [vmem:[#allocation5 + $0x64] sm:$0xf]
        %v376 = vld [vmem:[#allocation5 + $0x68] sm:$0xf]
        %v377 = vld [vmem:[#allocation5 + $0x6c] sm:$0xf]
        %v378 = vld [vmem:[#allocation5 + $0x70] sm:$0xf]
        %v379 = vld [vmem:[#allocation5 + $0x74] sm:$0xf]
        %v380 = vld [vmem:[#allocation5 + $0x78] sm:$0xf]
        %v381 = vld [vmem:[#allocation5 + $0x7c] sm:$0xf]
        %v382 = vld [vmem:[#allocation5 + $0x80] sm:$0xf]
        %v383 = vld [vmem:[#allocation5 + $0x84] sm:$0xf]
        %v384 = vld [vmem:[#allocation5 + $0x88] sm:$0xf]
        %v385 = vld [vmem:[#allocation5 + $0x8c] sm:$0xf]
        %v386 = vld [vmem:[#allocation5 + $0x90] sm:$0xf]
        %v387 = vld [vmem:[#allocation5 + $0x94] sm:$0xf]
        %v388 = vld [vmem:[#allocation5 + $0x98] sm:$0xf]
        %v389 = vld [vmem:[#allocation5 + $0x9c] sm:$0xf]
        %v390 = vld [vmem:[#allocation5 + $0xa0] sm:$0xf]
        %v391 = vld [vmem:[#allocation5 + $0xa4] sm:$0xf]
        %v392 = vld [vmem:[#allocation5 + $0xa8] sm:$0xf]
        %v393 = vld [vmem:[#allocation5 + $0xac] sm:$0xf]
        %v394 = vld [vmem:[#allocation5 + $0xb0] sm:$0xf]
        %v395 = vld [vmem:[#allocation5 + $0xb4] sm:$0xf]
        %v396 = vld [vmem:[#allocation5 + $0xb8] sm:$0xf]
        %v397 = vld [vmem:[#allocation5 + $0xbc] sm:$0xf]
        %v398 = vld [vmem:[#allocation5 + $0xc0] sm:$0xf]
        %v399 = vld [vmem:[#allocation5 + $0xc4] sm:$0xf]
        %v400 = vld [vmem:[#allocation5 + $0xc8] sm:$0xf]
        %v401 = vld [vmem:[#allocation5 + $0xcc] sm:$0xf]
        %v402 = vld [vmem:[#allocation5 + $0xd0] sm:$0xf]
        %v403 = vld [vmem:[#allocation5 + $0xd4] sm:$0xf]
        %v404 = vld [vmem:[#allocation5 + $0xd8] sm:$0xf]
        %v405 = vld [vmem:[#allocation5 + $0xdc] sm:$0xf]
        %v406 = vld [vmem:[#allocation5 + $0xe0] sm:$0xf]
        %v407 = vld [vmem:[#allocation5 + $0xe4] sm:$0xf]
        %v408 = vld [vmem:[#allocation5 + $0xe8] sm:$0xf]
        %v409 = vld [vmem:[#allocation5 + $0xec] sm:$0xf]
        %v410 = vld [vmem:[#allocation5 + $0xf0] sm:$0xf]
        %v411 = vld [vmem:[#allocation5 + $0xf4] sm:$0xf]
        %v412 = vld [vmem:[#allocation5 + $0xf8] sm:$0xf]
        %v413 = vld [vmem:[#allocation5 + $0xfc] sm:$0xf]
        %v414 = vld [vmem:[#allocation5 + $0x100] sm:$0xf]
        %v415 = vld [vmem:[#allocation5 + $0x104] sm:$0xf]
        %v416 = vld [vmem:[#allocation5 + $0x108] sm:$0xf]
        %v417 = vld [vmem:[#allocation5 + $0x10c] sm:$0xf]
        %v418 = vld [vmem:[#allocation5 + $0x110] sm:$0xf]
        %v419 = vld [vmem:[#allocation5 + $0x114] sm:$0xf]
        %v420 = vld [vmem:[#allocation5 + $0x118] sm:$0xf]
        %v421 = vld [vmem:[#allocation5 + $0x11c] sm:$0xf]
        %v422 = vld [vmem:[#allocation5 + $0x120] sm:$0xf]
        %v423 = vld [vmem:[#allocation5 + $0x124] sm:$0xf]
        %v424 = vld [vmem:[#allocation5 + $0x128] sm:$0xf]
        %v425 = vld [vmem:[#allocation5 + $0x12c] sm:$0xf]
        %v426 = vld [vmem:[#allocation5 + $0x130] sm:$0xf]
        %v427 = vld [vmem:[#allocation5 + $0x134] sm:$0xf]
        %v428 = vld [vmem:[#allocation5 + $0x138] sm:$0xf]
        %v429 = vld [vmem:[#allocation5 + $0x13c] sm:$0xf]
        %v510 = vunpack.c.l.b16 %v350
        %v511 = vunpack.c.l.b16 %v351
        %v512 = vunpack.c.l.b16 %v352
        %v513 = vunpack.c.l.b16 %v353
        %v514 = vunpack.c.l.b16 %v354
        %v515 = vunpack.c.l.b16 %v355
        %v516 = vunpack.c.l.b16 %v356
        %v517 = vunpack.c.l.b16 %v357
        %v518 = vunpack.c.l.b16 %v358
        %v519 = vunpack.c.l.b16 %v359
        %v520 = vunpack.c.l.b16 %v360
        %v521 = vunpack.c.l.b16 %v361
        %v522 = vunpack.c.l.b16 %v362
        %v523 = vunpack.c.l.b16 %v363
        %v524 = vunpack.c.l.b16 %v364
        %v525 = vunpack.c.l.b16 %v365
        %v526 = vunpack.c.l.b16 %v366
        %v527 = vunpack.c.l.b16 %v367
        %v528 = vunpack.c.l.b16 %v368
        %v529 = vunpack.c.l.b16 %v369
        %v530 = vunpack.c.l.b16 %v370
        %v531 = vunpack.c.l.b16 %v371
        %v532 = vunpack.c.l.b16 %v372
        %v533 = vunpack.c.l.b16 %v373
        %v534 = vunpack.c.l.b16 %v374
        %v535 = vunpack.c.l.b16 %v375
        %v536 = vunpack.c.l.b16 %v376
        %v537 = vunpack.c.l.b16 %v377
        %v538 = vunpack.c.l.b16 %v378
        %v539 = vunpack.c.l.b16 %v379
        %v540 = vunpack.c.l.b16 %v380
        %v541 = vunpack.c.l.b16 %v381
        %v542 = vunpack.c.l.b16 %v382
        %v543 = vunpack.c.l.b16 %v383
        %v544 = vunpack.c.l.b16 %v384
        %v545 = vunpack.c.l.b16 %v385
        %v546 = vunpack.c.l.b16 %v386
        %v547 = vunpack.c.l.b16 %v387
        %v548 = vunpack.c.l.b16 %v388
        %v549 = vunpack.c.l.b16 %v389
        %v550 = vunpack.c.l.b16 %v390
        %v551 = vunpack.c.l.b16 %v391
        %v552 = vunpack.c.l.b16 %v392
        %v553 = vunpack.c.l.b16 %v393
        %v554 = vunpack.c.l.b16 %v394
        %v555 = vunpack.c.l.b16 %v395
        %v556 = vunpack.c.l.b16 %v396
        %v557 = vunpack.c.l.b16 %v397
        %v558 = vunpack.c.l.b16 %v398
        %v559 = vunpack.c.l.b16 %v399
        %v560 = vunpack.c.l.b16 %v400
        %v561 = vunpack.c.l.b16 %v401
        %v562 = vunpack.c.l.b16 %v402
        %v563 = vunpack.c.l.b16 %v403
        %v564 = vunpack.c.l.b16 %v404
        %v565 = vunpack.c.l.b16 %v405
        %v566 = vunpack.c.l.b16 %v406
        %v567 = vunpack.c.l.b16 %v407
        %v568 = vunpack.c.l.b16 %v408
        %v569 = vunpack.c.l.b16 %v409
        %v570 = vunpack.c.l.b16 %v410
        %v571 = vunpack.c.l.b16 %v411
        %v572 = vunpack.c.l.b16 %v412
        %v573 = vunpack.c.l.b16 %v413
        %v574 = vunpack.c.l.b16 %v414
        %v575 = vunpack.c.l.b16 %v415
        %v576 = vunpack.c.l.b16 %v416
        %v577 = vunpack.c.l.b16 %v417
        %v578 = vunpack.c.l.b16 %v418
        %v579 = vunpack.c.l.b16 %v419
        %v580 = vunpack.c.l.b16 %v420
        %v581 = vunpack.c.l.b16 %v421
        %v582 = vunpack.c.l.b16 %v422
        %v583 = vunpack.c.l.b16 %v423
        %v584 = vunpack.c.l.b16 %v424
        %v585 = vunpack.c.l.b16 %v425
        %v586 = vunpack.c.l.b16 %v426
        %v587 = vunpack.c.l.b16 %v427
        %v588 = vunpack.c.l.b16 %v428
        %v589 = vunpack.c.l.b16 %v429
        %v590 = vpack.c.b16 %v511, %v510
        %v591 = vpack.c.b16 %v513, %v512
        %v592 = vpack.c.b16 %v515, %v514
        %v593 = vpack.c.b16 %v517, %v516
        %v594 = vpack.c.b16 %v519, %v518
        %v595 = vpack.c.b16 %v521, %v520
        %v596 = vpack.c.b16 %v523, %v522
        %v597 = vpack.c.b16 %v525, %v524
        %v598 = vpack.c.b16 %v527, %v526
        %v599 = vpack.c.b16 %v529, %v528
        %v600 = vpack.c.b16 %v531, %v530
        %v601 = vpack.c.b16 %v533, %v532
        %v602 = vpack.c.b16 %v535, %v534
        %v603 = vpack.c.b16 %v537, %v536
        %v604 = vpack.c.b16 %v539, %v538
        %v605 = vpack.c.b16 %v541, %v540
        %v606 = vpack.c.b16 %v543, %v542
        %v607 = vpack.c.b16 %v545, %v544
        %v608 = vpack.c.b16 %v547, %v546
        %v609 = vpack.c.b16 %v549, %v548
        %v610 = vpack.c.b16 %v551, %v550
        %v611 = vpack.c.b16 %v553, %v552
        %v612 = vpack.c.b16 %v555, %v554
        %v613 = vpack.c.b16 %v557, %v556
        %v614 = vpack.c.b16 %v559, %v558
        %v615 = vpack.c.b16 %v561, %v560
        %v616 = vpack.c.b16 %v563, %v562
        %v617 = vpack.c.b16 %v565, %v564
        %v618 = vpack.c.b16 %v567, %v566
        %v619 = vpack.c.b16 %v569, %v568
        %v620 = vpack.c.b16 %v571, %v570
        %v621 = vpack.c.b16 %v573, %v572
        %v622 = vpack.c.b16 %v575, %v574
        %v623 = vpack.c.b16 %v577, %v576
        %v624 = vpack.c.b16 %v579, %v578
        %v625 = vpack.c.b16 %v581, %v580
        %v626 = vpack.c.b16 %v583, %v582
        %v627 = vpack.c.b16 %v585, %v584
        %v628 = vpack.c.b16 %v587, %v586
        %v629 = vpack.c.b16 %v589, %v588
        %670 = vmatprep.subr.bf16.mxu0 0
        %671 = vmatpush1.bf16.msra.mxu0 %v597
        %672 = vmatprep.subr.bf16.mxu0 0
        %673 = vmatpush1.bf16.msra.mxu0 %v596
        %674 = vmatprep.subr.bf16.mxu0 0
        %675 = vmatpush1.bf16.msra.mxu0 %v595
        %676 = vmatprep.subr.bf16.mxu0 0
        %677 = vmatpush1.bf16.msra.mxu0 %v594
        %678 = vmatprep.subr.bf16.mxu0 0
        %679 = vmatpush1.bf16.msra.mxu0 %v593
        %680 = vmatprep.subr.bf16.mxu0 0
        %681 = vmatpush1.bf16.msra.mxu0 %v592
        %682 = vmatprep.subr.bf16.mxu0 0
        %683 = vmatpush1.bf16.msra.mxu0 %v591
        %684 = vmatprep.subr.bf16.mxu0 0
        %685 = vmatpush1.bf16.msra.mxu0 %v590
        %686 = vmatprep.subr.bf16.mxu0 0
        %687 = vmatpush2.bf16.msra.mxu0 %v605
        %688 = vmatprep.subr.bf16.mxu0 0
        %689 = vmatpush2.bf16.msra.mxu0 %v604
        %690 = vmatprep.subr.bf16.mxu0 0
        %691 = vmatpush2.bf16.msra.mxu0 %v603
        %692 = vmatprep.subr.bf16.mxu0 0
        %693 = vmatpush2.bf16.msra.mxu0 %v602
        %694 = vmatprep.subr.bf16.mxu0 0
        %695 = vmatpush2.bf16.msra.mxu0 %v601
        %696 = vmatprep.subr.bf16.mxu0 0
        %697 = vmatpush2.bf16.msra.mxu0 %v600
        %698 = vmatprep.subr.bf16.mxu0 0
        %699 = vmatpush2.bf16.msra.mxu0 %v599
        %700 = vmatprep.subr.bf16.mxu0 0
        %701 = vmatpush2.bf16.msra.mxu0 %v598
        %702 = vmatprep.mubr.bf16.mxu0 %v346
        %703 = vmatmul.mubr.bf16.gmra.mxu0 %v345
        %v704 = vpop.f32.mrf.mxu0
        %v705 = vadd.f32 0.0, %v704
        %v706 = vpop.f32.mrf.mxu0
        %v707 = vpop.f32.mrf.mxu0
        %v708 = vadd.f32 0.0, %v707
        %v709 = vpop.f32.mrf.mxu0
        %710 = vdwg.mxu0
        %711 = vmatprep.subr.bf16.mxu0 0
        %712 = vmatpush1.bf16.msra.mxu0 %v613
        %713 = vmatprep.subr.bf16.mxu0 0
        %714 = vmatpush1.bf16.msra.mxu0 %v612
        %715 = vmatprep.subr.bf16.mxu0 0
        %716 = vmatpush1.bf16.msra.mxu0 %v611
        %717 = vmatprep.subr.bf16.mxu0 0
        %718 = vmatpush1.bf16.msra.mxu0 %v610
        %719 = vmatprep.subr.bf16.mxu0 0
        %720 = vmatpush1.bf16.msra.mxu0 %v609
        %721 = vmatprep.subr.bf16.mxu0 0
        %722 = vmatpush1.bf16.msra.mxu0 %v608
        %723 = vmatprep.subr.bf16.mxu0 0
        %724 = vmatpush1.bf16.msra.mxu0 %v607
        %725 = vmatprep.subr.bf16.mxu0 0
        %726 = vmatpush1.bf16.msra.mxu0 %v606
        %727 = vmatprep.subr.bf16.mxu0 0
        %728 = vmatpush2.bf16.msra.mxu0 %v621
        %729 = vmatprep.subr.bf16.mxu0 0
        %730 = vmatpush2.bf16.msra.mxu0 %v620
        %731 = vmatprep.subr.bf16.mxu0 0
        %732 = vmatpush2.bf16.msra.mxu0 %v619
        %733 = vmatprep.subr.bf16.mxu0 0
        %734 = vmatpush2.bf16.msra.mxu0 %v618
        %735 = vmatprep.subr.bf16.mxu0 0
        %736 = vmatpush2.bf16.msra.mxu0 %v617
        %737 = vmatprep.subr.bf16.mxu0 0
        %738 = vmatpush2.bf16.msra.mxu0 %v616
        %739 = vmatprep.subr.bf16.mxu0 0
        %740 = vmatpush2.bf16.msra.mxu0 %v615
        %741 = vmatprep.subr.bf16.mxu0 0
        %742 = vmatpush2.bf16.msra.mxu0 %v614
        %743 = vmatprep.mubr.bf16.mxu0 %v348
        %744 = vmatmul.mubr.bf16.gmra.mxu0 %v347
        %v745 = vpop.f32.mrf.mxu0
        %v746 = vadd.f32 %v705, %v745
        %v747 = vpop.f32.mrf.mxu0
        %v748 = vpop.f32.mrf.mxu0
        %v749 = vadd.f32 %v708, %v748
        %v750 = vpop.f32.mrf.mxu0
        %751 = vdwg.mxu0
        %752 = vmatprep.subr.bf16.mxu0 0
        %753 = vmatpush1.bf16.msra.mxu0 %v629
        %754 = vmatprep.subr.bf16.mxu0 0
        %755 = vmatpush1.bf16.msra.mxu0 %v628
        %756 = vmatprep.subr.bf16.mxu0 0
        %757 = vmatpush1.bf16.msra.mxu0 %v627
        %758 = vmatprep.subr.bf16.mxu0 0
        %759 = vmatpush1.bf16.msra.mxu0 %v626
        %760 = vmatprep.subr.bf16.mxu0 0
        %761 = vmatpush1.bf16.msra.mxu0 %v625
        %762 = vmatprep.subr.bf16.mxu0 0
        %763 = vmatpush1.bf16.msra.mxu0 %v624
        %764 = vmatprep.subr.bf16.mxu0 0
        %765 = vmatpush1.bf16.msra.mxu0 %v623
        %766 = vmatprep.subr.bf16.mxu0 0
        %767 = vmatpush1.bf16.msra.mxu0 %v622
        %768 = vmatprep.subr.bf16.mxu0 0
        %769 = vmatpush2.bf16.msra.mxu0 0
        %770 = vmatprep.subr.bf16.mxu0 0
        %771 = vmatpush2.bf16.msra.mxu0 0
        %772 = vmatprep.subr.bf16.mxu0 0
        %773 = vmatpush2.bf16.msra.mxu0 0
        %774 = vmatprep.subr.bf16.mxu0 0
        %775 = vmatpush2.bf16.msra.mxu0 0
        %776 = vmatprep.subr.bf16.mxu0 0
        %777 = vmatpush2.bf16.msra.mxu0 0
        %778 = vmatprep.subr.bf16.mxu0 0
        %779 = vmatpush2.bf16.msra.mxu0 0
        %780 = vmatprep.subr.bf16.mxu0 0
        %781 = vmatpush2.bf16.msra.mxu0 0
        %782 = vmatprep.subr.bf16.mxu0 0
        %783 = vmatpush2.bf16.msra.mxu0 0
        %784 = vmatprep.mubr.bf16.mxu0 0
        %785 = vmatmul.mubr.bf16.gmra.mxu0 %v349
        %v786 = vpop.f32.mrf.mxu0
        %v787 = vadd.f32 %v746, %v786
        %v788 = vpop.f32.mrf.mxu0
        %v789 = vpop.f32.mrf.mxu0
        %v790 = vadd.f32 %v749, %v789
        %v791 = vpop.f32.mrf.mxu0
        %792 = vdwg.mxu0
        %v793 = vld [vmem:[#allocation7] sm:$0x1]
        %v794 = vlaneseq
        %v795 = vshrl.u32 %v794, 7
        %v796 = vsub.s32 0, %v795
        %v797 = vrot.slane %v793, %v796
        %v798 = vmul.f32 %v787, %v797
        %v799 = vmul.f32 %v790, %v797
        %v800 = vld [vmem:[#allocation7 + $0x1] sm:$0x1]
        %v801 = vlaneseq
        %v802 = vshrl.u32 %v801, 7
        %v803 = vsub.s32 0, %v802
        %v804 = vrot.slane %v800, %v803
        %v805 = vadd.f32 %v798, %v804
        %v806 = vadd.f32 %v799, %v804
        %v807 = vmax.f32 %v805, 0.0
        %v808 = vmax.f32 %v806, 0.0
        %v811 = vrot.slane %v807, 6
        %v812 = vrot.slane %v808, 6
        %v813 = vsel %vm302, %v811, %v812
        %v817 = vsel %vm302, 0.0, %v811
        %v818 = vsel %vm302, %v812, 0.0
        %v821 = vrot.slane %v817, 1
        %v822 = vrot.slane %v813, 1
        %v823 = vsel %vm313, %v821, %v822
        %v824 = vrot.slane %v818, 1
        %v825 = vsel %vm313, %v822, %v824
        %v828 = vrot.slane %v817, 2
        %v829 = vrot.slane %v813, 2
        %v830 = vsel %vm321, %v828, %v829
        %v831 = vrot.slane %v818, 2
        %v832 = vsel %vm321, %v829, %v831
        %v835 = vrot.slane %v817, 3
        %v836 = vrot.slane %v813, 3
        %v837 = vsel %vm329, %v835, %v836
        %v838 = vrot.slane %v818, 3
        %v839 = vsel %vm329, %v836, %v838
        %v842 = vpack.c.bf16 %v813, %v817
        %v843 = vpack.c.bf16 %v825, %v823
        %v844 = vpack.c.bf16 %v832, %v830
        %v845 = vpack.c.bf16 %v839, %v837
        %v846 = vld [vmem:[#allocation5 + $0x140] sm:$0xf]
        %v847 = vld [vmem:[#allocation5 + $0x144] sm:$0xf]
        %v848 = vld [vmem:[#allocation5 + $0x148] sm:$0xf]
        %v849 = vld [vmem:[#allocation5 + $0x14c] sm:$0xf]
        %v850 = vld [vmem:[#allocation5 + $0x150] sm:$0xf]
        %v851 = vld [vmem:[#allocation5 + $0x154] sm:$0xf]
        %v852 = vld [vmem:[#allocation5 + $0x158] sm:$0xf]
        %v853 = vld [vmem:[#allocation5 + $0x15c] sm:$0xf]
        %v854 = vld [vmem:[#allocation5 + $0x160] sm:$0xf]
        %v855 = vld [vmem:[#allocation5 + $0x164] sm:$0xf]
        %v856 = vld [vmem:[#allocation5 + $0x168] sm:$0xf]
        %v857 = vld [vmem:[#allocation5 + $0x16c] sm:$0xf]
        %v858 = vld [vmem:[#allocation5 + $0x170] sm:$0xf]
        %v859 = vld [vmem:[#allocation5 + $0x174] sm:$0xf]
        %v860 = vld [vmem:[#allocation5 + $0x178] sm:$0xf]
        %v861 = vld [vmem:[#allocation5 + $0x17c] sm:$0xf]
        %v862 = vld [vmem:[#allocation5 + $0x180] sm:$0xf]
        %v863 = vld [vmem:[#allocation5 + $0x184] sm:$0xf]
        %v864 = vld [vmem:[#allocation5 + $0x188] sm:$0xf]
        %v865 = vld [vmem:[#allocation5 + $0x18c] sm:$0xf]
        %v866 = vld [vmem:[#allocation5 + $0x190] sm:$0xf]
        %v867 = vld [vmem:[#allocation5 + $0x194] sm:$0xf]
        %v868 = vld [vmem:[#allocation5 + $0x198] sm:$0xf]
        %v869 = vld [vmem:[#allocation5 + $0x19c] sm:$0xf]
        %v870 = vld [vmem:[#allocation5 + $0x1a0] sm:$0xf]
        %v871 = vld [vmem:[#allocation5 + $0x1a4] sm:$0xf]
        %v872 = vld [vmem:[#allocation5 + $0x1a8] sm:$0xf]
        %v873 = vld [vmem:[#allocation5 + $0x1ac] sm:$0xf]
        %v874 = vld [vmem:[#allocation5 + $0x1b0] sm:$0xf]
        %v875 = vld [vmem:[#allocation5 + $0x1b4] sm:$0xf]
        %v876 = vld [vmem:[#allocation5 + $0x1b8] sm:$0xf]
        %v877 = vld [vmem:[#allocation5 + $0x1bc] sm:$0xf]
        %v878 = vld [vmem:[#allocation5 + $0x1c0] sm:$0xf]
        %v879 = vld [vmem:[#allocation5 + $0x1c4] sm:$0xf]
        %v880 = vld [vmem:[#allocation5 + $0x1c8] sm:$0xf]
        %v881 = vld [vmem:[#allocation5 + $0x1cc] sm:$0xf]
        %v882 = vld [vmem:[#allocation5 + $0x1d0] sm:$0xf]
        %v883 = vld [vmem:[#allocation5 + $0x1d4] sm:$0xf]
        %v884 = vld [vmem:[#allocation5 + $0x1d8] sm:$0xf]
        %v885 = vld [vmem:[#allocation5 + $0x1dc] sm:$0xf]
        %v886 = vld [vmem:[#allocation5 + $0x1e0] sm:$0xf]
        %v887 = vld [vmem:[#allocation5 + $0x1e4] sm:$0xf]
        %v888 = vld [vmem:[#allocation5 + $0x1e8] sm:$0xf]
        %v889 = vld [vmem:[#allocation5 + $0x1ec] sm:$0xf]
        %v890 = vld [vmem:[#allocation5 + $0x1f0] sm:$0xf]
        %v891 = vld [vmem:[#allocation5 + $0x1f4] sm:$0xf]
        %v892 = vld [vmem:[#allocation5 + $0x1f8] sm:$0xf]
        %v893 = vld [vmem:[#allocation5 + $0x1fc] sm:$0xf]
        %v894 = vld [vmem:[#allocation5 + $0x200] sm:$0xf]
        %v895 = vld [vmem:[#allocation5 + $0x204] sm:$0xf]
        %v896 = vld [vmem:[#allocation5 + $0x208] sm:$0xf]
        %v897 = vld [vmem:[#allocation5 + $0x20c] sm:$0xf]
        %v898 = vld [vmem:[#allocation5 + $0x210] sm:$0xf]
        %v899 = vld [vmem:[#allocation5 + $0x214] sm:$0xf]
        %v900 = vld [vmem:[#allocation5 + $0x218] sm:$0xf]
        %v901 = vld [vmem:[#allocation5 + $0x21c] sm:$0xf]
        %v902 = vld [vmem:[#allocation5 + $0x220] sm:$0xf]
        %v903 = vld [vmem:[#allocation5 + $0x224] sm:$0xf]
        %v904 = vld [vmem:[#allocation5 + $0x228] sm:$0xf]
        %v905 = vld [vmem:[#allocation5 + $0x22c] sm:$0xf]
        %v906 = vld [vmem:[#allocation5 + $0x230] sm:$0xf]
        %v907 = vld [vmem:[#allocation5 + $0x234] sm:$0xf]
        %v908 = vld [vmem:[#allocation5 + $0x238] sm:$0xf]
        %v909 = vld [vmem:[#allocation5 + $0x23c] sm:$0xf]
        %v974 = vunpack.c.l.b16 %v846
        %v975 = vunpack.c.l.b16 %v847
        %v976 = vunpack.c.l.b16 %v848
        %v977 = vunpack.c.l.b16 %v849
        %v978 = vunpack.c.l.b16 %v850
        %v979 = vunpack.c.l.b16 %v851
        %v980 = vunpack.c.l.b16 %v852
        %v981 = vunpack.c.l.b16 %v853
        %v982 = vunpack.c.l.b16 %v854
        %v983 = vunpack.c.l.b16 %v855
        %v984 = vunpack.c.l.b16 %v856
        %v985 = vunpack.c.l.b16 %v857
        %v986 = vunpack.c.l.b16 %v858
        %v987 = vunpack.c.l.b16 %v859
        %v988 = vunpack.c.l.b16 %v860
        %v989 = vunpack.c.l.b16 %v861
        %v990 = vunpack.c.l.b16 %v862
        %v991 = vunpack.c.l.b16 %v863
        %v992 = vunpack.c.l.b16 %v864
        %v993 = vunpack.c.l.b16 %v865
        %v994 = vunpack.c.l.b16 %v866
        %v995 = vunpack.c.l.b16 %v867
        %v996 = vunpack.c.l.b16 %v868
        %v997 = vunpack.c.l.b16 %v869
        %v998 = vunpack.c.l.b16 %v870
        %v999 = vunpack.c.l.b16 %v871
        %v1000 = vunpack.c.l.b16 %v872
        %v1001 = vunpack.c.l.b16 %v873
        %v1002 = vunpack.c.l.b16 %v874
        %v1003 = vunpack.c.l.b16 %v875
        %v1004 = vunpack.c.l.b16 %v876
        %v1005 = vunpack.c.l.b16 %v877
        %v1006 = vunpack.c.l.b16 %v878
        %v1007 = vunpack.c.l.b16 %v879
        %v1008 = vunpack.c.l.b16 %v880
        %v1009 = vunpack.c.l.b16 %v881
        %v1010 = vunpack.c.l.b16 %v882
        %v1011 = vunpack.c.l.b16 %v883
        %v1012 = vunpack.c.l.b16 %v884
        %v1013 = vunpack.c.l.b16 %v885
        %v1014 = vunpack.c.l.b16 %v886
        %v1015 = vunpack.c.l.b16 %v887
        %v1016 = vunpack.c.l.b16 %v888
        %v1017 = vunpack.c.l.b16 %v889
        %v1018 = vunpack.c.l.b16 %v890
        %v1019 = vunpack.c.l.b16 %v891
        %v1020 = vunpack.c.l.b16 %v892
        %v1021 = vunpack.c.l.b16 %v893
        %v1022 = vunpack.c.l.b16 %v894
        %v1023 = vunpack.c.l.b16 %v895
        %v1024 = vunpack.c.l.b16 %v896
        %v1025 = vunpack.c.l.b16 %v897
        %v1026 = vunpack.c.l.b16 %v898
        %v1027 = vunpack.c.l.b16 %v899
        %v1028 = vunpack.c.l.b16 %v900
        %v1029 = vunpack.c.l.b16 %v901
        %v1030 = vunpack.c.l.b16 %v902
        %v1031 = vunpack.c.l.b16 %v903
        %v1032 = vunpack.c.l.b16 %v904
        %v1033 = vunpack.c.l.b16 %v905
        %v1034 = vunpack.c.l.b16 %v906
        %v1035 = vunpack.c.l.b16 %v907
        %v1036 = vunpack.c.l.b16 %v908
        %v1037 = vunpack.c.l.b16 %v909
        %v1038 = vpack.c.b16 %v975, %v974
        %v1039 = vpack.c.b16 %v977, %v976
        %v1040 = vpack.c.b16 %v979, %v978
        %v1041 = vpack.c.b16 %v981, %v980
        %v1042 = vpack.c.b16 %v983, %v982
        %v1043 = vpack.c.b16 %v985, %v984
        %v1044 = vpack.c.b16 %v987, %v986
        %v1045 = vpack.c.b16 %v989, %v988
        %v1046 = vpack.c.b16 %v991, %v990
        %v1047 = vpack.c.b16 %v993, %v992
        %v1048 = vpack.c.b16 %v995, %v994
        %v1049 = vpack.c.b16 %v997, %v996
        %v1050 = vpack.c.b16 %v999, %v998
        %v1051 = vpack.c.b16 %v1001, %v1000
        %v1052 = vpack.c.b16 %v1003, %v1002
        %v1053 = vpack.c.b16 %v1005, %v1004
        %v1054 = vpack.c.b16 %v1007, %v1006
        %v1055 = vpack.c.b16 %v1009, %v1008
        %v1056 = vpack.c.b16 %v1011, %v1010
        %v1057 = vpack.c.b16 %v1013, %v1012
        %v1058 = vpack.c.b16 %v1015, %v1014
        %v1059 = vpack.c.b16 %v1017, %v1016
        %v1060 = vpack.c.b16 %v1019, %v1018
        %v1061 = vpack.c.b16 %v1021, %v1020
        %v1062 = vpack.c.b16 %v1023, %v1022
        %v1063 = vpack.c.b16 %v1025, %v1024
        %v1064 = vpack.c.b16 %v1027, %v1026
        %v1065 = vpack.c.b16 %v1029, %v1028
        %v1066 = vpack.c.b16 %v1031, %v1030
        %v1067 = vpack.c.b16 %v1033, %v1032
        %v1068 = vpack.c.b16 %v1035, %v1034
        %v1069 = vpack.c.b16 %v1037, %v1036
        %1102 = vmatprep.subr.bf16.mxu0 0
        %1103 = vmatpush1.bf16.msra.mxu0 %v1045
        %1104 = vmatprep.subr.bf16.mxu0 0
        %1105 = vmatpush1.bf16.msra.mxu0 %v1044
        %1106 = vmatprep.subr.bf16.mxu0 0
        %1107 = vmatpush1.bf16.msra.mxu0 %v1043
        %1108 = vmatprep.subr.bf16.mxu0 0
        %1109 = vmatpush1.bf16.msra.mxu0 %v1042
        %1110 = vmatprep.subr.bf16.mxu0 0
        %1111 = vmatpush1.bf16.msra.mxu0 %v1041
        %1112 = vmatprep.subr.bf16.mxu0 0
        %1113 = vmatpush1.bf16.msra.mxu0 %v1040
        %1114 = vmatprep.subr.bf16.mxu0 0
        %1115 = vmatpush1.bf16.msra.mxu0 %v1039
        %1116 = vmatprep.subr.bf16.mxu0 0
        %1117 = vmatpush1.bf16.msra.mxu0 %v1038
        %1118 = vmatprep.subr.bf16.mxu0 0
        %1119 = vmatpush2.bf16.msra.mxu0 %v1053
        %1120 = vmatprep.subr.bf16.mxu0 0
        %1121 = vmatpush2.bf16.msra.mxu0 %v1052
        %1122 = vmatprep.subr.bf16.mxu0 0
        %1123 = vmatpush2.bf16.msra.mxu0 %v1051
        %1124 = vmatprep.subr.bf16.mxu0 0
        %1125 = vmatpush2.bf16.msra.mxu0 %v1050
        %1126 = vmatprep.subr.bf16.mxu0 0
        %1127 = vmatpush2.bf16.msra.mxu0 %v1049
        %1128 = vmatprep.subr.bf16.mxu0 0
        %1129 = vmatpush2.bf16.msra.mxu0 %v1048
        %1130 = vmatprep.subr.bf16.mxu0 0
        %1131 = vmatpush2.bf16.msra.mxu0 %v1047
        %1132 = vmatprep.subr.bf16.mxu0 0
        %1133 = vmatpush2.bf16.msra.mxu0 %v1046
        %1134 = vmatprep.mubr.bf16.mxu0 %v843
        %1135 = vmatmul.mubr.bf16.gmra.mxu0 %v842
        %v1136 = vpop.f32.mrf.mxu0
        %v1137 = vadd.f32 0.0, %v1136
        %v1138 = vpop.f32.mrf.mxu0
        %v1139 = vpop.f32.mrf.mxu0
        %v1140 = vadd.f32 0.0, %v1139
        %v1141 = vpop.f32.mrf.mxu0
        %1142 = vdwg.mxu0
        %1143 = vmatprep.subr.bf16.mxu0 0
        %1144 = vmatpush1.bf16.msra.mxu0 %v1061
        %1145 = vmatprep.subr.bf16.mxu0 0
        %1146 = vmatpush1.bf16.msra.mxu0 %v1060
        %1147 = vmatprep.subr.bf16.mxu0 0
        %1148 = vmatpush1.bf16.msra.mxu0 %v1059
        %1149 = vmatprep.subr.bf16.mxu0 0
        %1150 = vmatpush1.bf16.msra.mxu0 %v1058
        %1151 = vmatprep.subr.bf16.mxu0 0
        %1152 = vmatpush1.bf16.msra.mxu0 %v1057
        %1153 = vmatprep.subr.bf16.mxu0 0
        %1154 = vmatpush1.bf16.msra.mxu0 %v1056
        %1155 = vmatprep.subr.bf16.mxu0 0
        %1156 = vmatpush1.bf16.msra.mxu0 %v1055
        %1157 = vmatprep.subr.bf16.mxu0 0
        %1158 = vmatpush1.bf16.msra.mxu0 %v1054
        %1159 = vmatprep.subr.bf16.mxu0 0
        %1160 = vmatpush2.bf16.msra.mxu0 %v1069
        %1161 = vmatprep.subr.bf16.mxu0 0
        %1162 = vmatpush2.bf16.msra.mxu0 %v1068
        %1163 = vmatprep.subr.bf16.mxu0 0
        %1164 = vmatpush2.bf16.msra.mxu0 %v1067
        %1165 = vmatprep.subr.bf16.mxu0 0
        %1166 = vmatpush2.bf16.msra.mxu0 %v1066
        %1167 = vmatprep.subr.bf16.mxu0 0
        %1168 = vmatpush2.bf16.msra.mxu0 %v1065
        %1169 = vmatprep.subr.bf16.mxu0 0
        %1170 = vmatpush2.bf16.msra.mxu0 %v1064
        %1171 = vmatprep.subr.bf16.mxu0 0
        %1172 = vmatpush2.bf16.msra.mxu0 %v1063
        %1173 = vmatprep.subr.bf16.mxu0 0
        %1174 = vmatpush2.bf16.msra.mxu0 %v1062
        %1175 = vmatprep.mubr.bf16.mxu0 %v845
        %1176 = vmatmul.mubr.bf16.gmra.mxu0 %v844
        %v1177 = vpop.f32.mrf.mxu0
        %v1178 = vadd.f32 %v1137, %v1177
        %v1179 = vpop.f32.mrf.mxu0
        %v1180 = vpop.f32.mrf.mxu0
        %v1181 = vadd.f32 %v1140, %v1180
        %v1182 = vpop.f32.mrf.mxu0
        %1183 = vdwg.mxu0
        %v1184 = vld [vmem:[#allocation7 + $0x2] sm:$0x1]
        %v1185 = vlaneseq
        %v1186 = vshrl.u32 %v1185, 7
        %v1187 = vsub.s32 0, %v1186
        %v1188 = vrot.slane %v1184, %v1187
        %v1189 = vmul.f32 %v1178, %v1188
        %v1190 = vmul.f32 %v1181, %v1188
        %v1191 = vld [vmem:[#allocation7 + $0x3] sm:$0x1]
        %v1192 = vlaneseq
        %v1193 = vshrl.u32 %v1192, 7
        %v1194 = vsub.s32 0, %v1193
        %v1195 = vrot.slane %v1191, %v1194
        %v1196 = vadd.f32 %v1189, %v1195
        %v1197 = vadd.f32 %v1190, %v1195
        %v1198 = vmax.f32 %v1196, 0.0
        %v1199 = vmax.f32 %v1197, 0.0
        %vm1202 = vcmask 1040384
        %v1203 = vrot.slane %v1198, 7
        %v1204 = vrot.slane %v1199, 7
        %v1205 = vsel %vm1202, %v1203, %v1204
        %v1209 = vsel %vm1202, 0.0, %v1203
        %v1210 = vsel %vm1202, %v1204, 0.0
        %v1213 = vrot.slane %v1209, 1
        %v1214 = vrot.slane %v1205, 1
        %v1215 = vsel %vm313, %v1213, %v1214
        %v1216 = vrot.slane %v1210, 1
        %v1217 = vsel %vm313, %v1214, %v1216
        %v1220 = vrot.slane %v1209, 2
        %v1221 = vrot.slane %v1205, 2
        %v1222 = vsel %vm321, %v1220, %v1221
        %v1223 = vrot.slane %v1210, 2
        %v1224 = vsel %vm321, %v1221, %v1223
        %v1227 = vpack.c.bf16 %v1205, %v1209
        %v1228 = vpack.c.bf16 %v1217, %v1215
        %v1229 = vpack.c.bf16 %v1224, %v1222
        %v1230 = vld [vmem:[#allocation5 + $0x240] sm:$0xf]
        %v1231 = vld [vmem:[#allocation5 + $0x244] sm:$0xf]
        %v1232 = vld [vmem:[#allocation5 + $0x248] sm:$0xf]
        %v1233 = vld [vmem:[#allocation5 + $0x24c] sm:$0xf]
        %v1234 = vld [vmem:[#allocation5 + $0x250] sm:$0xf]
        %v1235 = vld [vmem:[#allocation5 + $0x254] sm:$0xf]
        %v1236 = vld [vmem:[#allocation5 + $0x258] sm:$0xf]
        %v1237 = vld [vmem:[#allocation5 + $0x25c] sm:$0xf]
        %v1238 = vld [vmem:[#allocation5 + $0x260] sm:$0xf]
        %v1239 = vld [vmem:[#allocation5 + $0x264] sm:$0xf]
        %v1240 = vld [vmem:[#allocation5 + $0x268] sm:$0xf]
        %v1241 = vld [vmem:[#allocation5 + $0x26c] sm:$0xf]
        %v1242 = vld [vmem:[#allocation5 + $0x270] sm:$0xf]
        %v1243 = vld [vmem:[#allocation5 + $0x274] sm:$0xf]
        %v1244 = vld [vmem:[#allocation5 + $0x278] sm:$0xf]
        %v1245 = vld [vmem:[#allocation5 + $0x27c] sm:$0xf]
        %v1246 = vld [vmem:[#allocation5 + $0x280] sm:$0xf]
        %v1247 = vld [vmem:[#allocation5 + $0x284] sm:$0xf]
        %v1248 = vld [vmem:[#allocation5 + $0x288] sm:$0xf]
        %v1249 = vld [vmem:[#allocation5 + $0x28c] sm:$0xf]
        %v1250 = vld [vmem:[#allocation5 + $0x290] sm:$0xf]
        %v1251 = vld [vmem:[#allocation5 + $0x294] sm:$0xf]
        %v1252 = vld [vmem:[#allocation5 + $0x298] sm:$0xf]
        %v1253 = vld [vmem:[#allocation5 + $0x29c] sm:$0xf]
        %v1254 = vld [vmem:[#allocation5 + $0x2a0] sm:$0xf]
        %v1255 = vld [vmem:[#allocation5 + $0x2a4] sm:$0xf]
        %v1256 = vld [vmem:[#allocation5 + $0x2a8] sm:$0xf]
        %v1257 = vld [vmem:[#allocation5 + $0x2ac] sm:$0xf]
        %v1258 = vld [vmem:[#allocation5 + $0x2b0] sm:$0xf]
        %v1259 = vld [vmem:[#allocation5 + $0x2b4] sm:$0xf]
        %v1260 = vld [vmem:[#allocation5 + $0x2b8] sm:$0xf]
        %v1261 = vld [vmem:[#allocation5 + $0x2bc] sm:$0xf]
        %v1262 = vld [vmem:[#allocation5 + $0x2c0] sm:$0xf]
        %v1263 = vld [vmem:[#allocation5 + $0x2c4] sm:$0xf]
        %v1264 = vld [vmem:[#allocation5 + $0x2c8] sm:$0xf]
        %v1265 = vld [vmem:[#allocation5 + $0x2cc] sm:$0xf]
        %v1266 = vld [vmem:[#allocation5 + $0x2d0] sm:$0xf]
        %v1267 = vld [vmem:[#allocation5 + $0x2d4] sm:$0xf]
        %v1268 = vld [vmem:[#allocation5 + $0x2d8] sm:$0xf]
        %v1269 = vld [vmem:[#allocation5 + $0x2dc] sm:$0xf]
        %v1270 = vld [vmem:[#allocation5 + $0x2e0] sm:$0xf]
        %v1271 = vld [vmem:[#allocation5 + $0x2e4] sm:$0xf]
        %v1272 = vld [vmem:[#allocation5 + $0x2e8] sm:$0xf]
        %v1273 = vld [vmem:[#allocation5 + $0x2ec] sm:$0xf]
        %v1274 = vld [vmem:[#allocation5 + $0x2f0] sm:$0xf]
        %v1275 = vld [vmem:[#allocation5 + $0x2f4] sm:$0xf]
        %v1276 = vld [vmem:[#allocation5 + $0x2f8] sm:$0xf]
        %v1277 = vld [vmem:[#allocation5 + $0x2fc] sm:$0xf]
        %v1326 = vunpack.c.l.b16 %v1230
        %v1327 = vunpack.c.l.b16 %v1231
        %v1328 = vunpack.c.l.b16 %v1232
        %v1329 = vunpack.c.l.b16 %v1233
        %v1330 = vunpack.c.l.b16 %v1234
        %v1331 = vunpack.c.l.b16 %v1235
        %v1332 = vunpack.c.l.b16 %v1236
        %v1333 = vunpack.c.l.b16 %v1237
        %v1334 = vunpack.c.l.b16 %v1238
        %v1335 = vunpack.c.l.b16 %v1239
        %v1336 = vunpack.c.l.b16 %v1240
        %v1337 = vunpack.c.l.b16 %v1241
        %v1338 = vunpack.c.l.b16 %v1242
        %v1339 = vunpack.c.l.b16 %v1243
        %v1340 = vunpack.c.l.b16 %v1244
        %v1341 = vunpack.c.l.b16 %v1245
        %v1342 = vunpack.c.l.b16 %v1246
        %v1343 = vunpack.c.l.b16 %v1247
        %v1344 = vunpack.c.l.b16 %v1248
        %v1345 = vunpack.c.l.b16 %v1249
        %v1346 = vunpack.c.l.b16 %v1250
        %v1347 = vunpack.c.l.b16 %v1251
        %v1348 = vunpack.c.l.b16 %v1252
        %v1349 = vunpack.c.l.b16 %v1253
        %v1350 = vunpack.c.l.b16 %v1254
        %v1351 = vunpack.c.l.b16 %v1255
        %v1352 = vunpack.c.l.b16 %v1256
        %v1353 = vunpack.c.l.b16 %v1257
        %v1354 = vunpack.c.l.b16 %v1258
        %v1355 = vunpack.c.l.b16 %v1259
        %v1356 = vunpack.c.l.b16 %v1260
        %v1357 = vunpack.c.l.b16 %v1261
        %v1358 = vunpack.c.l.b16 %v1262
        %v1359 = vunpack.c.l.b16 %v1263
        %v1360 = vunpack.c.l.b16 %v1264
        %v1361 = vunpack.c.l.b16 %v1265
        %v1362 = vunpack.c.l.b16 %v1266
        %v1363 = vunpack.c.l.b16 %v1267
        %v1364 = vunpack.c.l.b16 %v1268
        %v1365 = vunpack.c.l.b16 %v1269
        %v1366 = vunpack.c.l.b16 %v1270
        %v1367 = vunpack.c.l.b16 %v1271
        %v1368 = vunpack.c.l.b16 %v1272
        %v1369 = vunpack.c.l.b16 %v1273
        %v1370 = vunpack.c.l.b16 %v1274
        %v1371 = vunpack.c.l.b16 %v1275
        %v1372 = vunpack.c.l.b16 %v1276
        %v1373 = vunpack.c.l.b16 %v1277
        %v1374 = vpack.c.b16 %v1327, %v1326
        %v1375 = vpack.c.b16 %v1329, %v1328
        %v1376 = vpack.c.b16 %v1331, %v1330
        %v1377 = vpack.c.b16 %v1333, %v1332
        %v1378 = vpack.c.b16 %v1335, %v1334
        %v1379 = vpack.c.b16 %v1337, %v1336
        %v1380 = vpack.c.b16 %v1339, %v1338
        %v1381 = vpack.c.b16 %v1341, %v1340
        %v1382 = vpack.c.b16 %v1343, %v1342
        %v1383 = vpack.c.b16 %v1345, %v1344
        %v1384 = vpack.c.b16 %v1347, %v1346
        %v1385 = vpack.c.b16 %v1349, %v1348
        %v1386 = vpack.c.b16 %v1351, %v1350
        %v1387 = vpack.c.b16 %v1353, %v1352
        %v1388 = vpack.c.b16 %v1355, %v1354
        %v1389 = vpack.c.b16 %v1357, %v1356
        %v1390 = vpack.c.b16 %v1359, %v1358
        %v1391 = vpack.c.b16 %v1361, %v1360
        %v1392 = vpack.c.b16 %v1363, %v1362
        %v1393 = vpack.c.b16 %v1365, %v1364
        %v1394 = vpack.c.b16 %v1367, %v1366
        %v1395 = vpack.c.b16 %v1369, %v1368
        %v1396 = vpack.c.b16 %v1371, %v1370
        %v1397 = vpack.c.b16 %v1373, %v1372
        %1422 = vmatprep.subr.bf16.mxu0 0
        %1423 = vmatpush1.bf16.msra.mxu0 %v1381
        %1424 = vmatprep.subr.bf16.mxu0 0
        %1425 = vmatpush1.bf16.msra.mxu0 %v1380
        %1426 = vmatprep.subr.bf16.mxu0 0
        %1427 = vmatpush1.bf16.msra.mxu0 %v1379
        %1428 = vmatprep.subr.bf16.mxu0 0
        %1429 = vmatpush1.bf16.msra.mxu0 %v1378
        %1430 = vmatprep.subr.bf16.mxu0 0
        %1431 = vmatpush1.bf16.msra.mxu0 %v1377
        %1432 = vmatprep.subr.bf16.mxu0 0
        %1433 = vmatpush1.bf16.msra.mxu0 %v1376
        %1434 = vmatprep.subr.bf16.mxu0 0
        %1435 = vmatpush1.bf16.msra.mxu0 %v1375
        %1436 = vmatprep.subr.bf16.mxu0 0
        %1437 = vmatpush1.bf16.msra.mxu0 %v1374
        %1438 = vmatprep.subr.bf16.mxu0 0
        %1439 = vmatpush2.bf16.msra.mxu0 %v1389
        %1440 = vmatprep.subr.bf16.mxu0 0
        %1441 = vmatpush2.bf16.msra.mxu0 %v1388
        %1442 = vmatprep.subr.bf16.mxu0 0
        %1443 = vmatpush2.bf16.msra.mxu0 %v1387
        %1444 = vmatprep.subr.bf16.mxu0 0
        %1445 = vmatpush2.bf16.msra.mxu0 %v1386
        %1446 = vmatprep.subr.bf16.mxu0 0
        %1447 = vmatpush2.bf16.msra.mxu0 %v1385
        %1448 = vmatprep.subr.bf16.mxu0 0
        %1449 = vmatpush2.bf16.msra.mxu0 %v1384
        %1450 = vmatprep.subr.bf16.mxu0 0
        %1451 = vmatpush2.bf16.msra.mxu0 %v1383
        %1452 = vmatprep.subr.bf16.mxu0 0
        %1453 = vmatpush2.bf16.msra.mxu0 %v1382
        %1454 = vmatprep.mubr.bf16.mxu0 %v1228
        %1455 = vmatmul.mubr.bf16.gmra.mxu0 %v1227
        %v1456 = vpop.f32.mrf.mxu0
        %v1457 = vadd.f32 0.0, %v1456
        %v1458 = vpop.f32.mrf.mxu0
        %v1459 = vpop.f32.mrf.mxu0
        %v1460 = vadd.f32 0.0, %v1459
        %v1461 = vpop.f32.mrf.mxu0
        %1462 = vdwg.mxu0
        %1463 = vmatprep.subr.bf16.mxu0 0
        %1464 = vmatpush1.bf16.msra.mxu0 %v1397
        %1465 = vmatprep.subr.bf16.mxu0 0
        %1466 = vmatpush1.bf16.msra.mxu0 %v1396
        %1467 = vmatprep.subr.bf16.mxu0 0
        %1468 = vmatpush1.bf16.msra.mxu0 %v1395
        %1469 = vmatprep.subr.bf16.mxu0 0
        %1470 = vmatpush1.bf16.msra.mxu0 %v1394
        %1471 = vmatprep.subr.bf16.mxu0 0
        %1472 = vmatpush1.bf16.msra.mxu0 %v1393
        %1473 = vmatprep.subr.bf16.mxu0 0
        %1474 = vmatpush1.bf16.msra.mxu0 %v1392
        %1475 = vmatprep.subr.bf16.mxu0 0
        %1476 = vmatpush1.bf16.msra.mxu0 %v1391
        %1477 = vmatprep.subr.bf16.mxu0 0
        %1478 = vmatpush1.bf16.msra.mxu0 %v1390
        %1479 = vmatprep.subr.bf16.mxu0 0
        %1480 = vmatpush2.bf16.msra.mxu0 0
        %1481 = vmatprep.subr.bf16.mxu0 0
        %1482 = vmatpush2.bf16.msra.mxu0 0
        %1483 = vmatprep.subr.bf16.mxu0 0
        %1484 = vmatpush2.bf16.msra.mxu0 0
        %1485 = vmatprep.subr.bf16.mxu0 0
        %1486 = vmatpush2.bf16.msra.mxu0 0
        %1487 = vmatprep.subr.bf16.mxu0 0
        %1488 = vmatpush2.bf16.msra.mxu0 0
        %1489 = vmatprep.subr.bf16.mxu0 0
        %1490 = vmatpush2.bf16.msra.mxu0 0
        %1491 = vmatprep.subr.bf16.mxu0 0
        %1492 = vmatpush2.bf16.msra.mxu0 0
        %1493 = vmatprep.subr.bf16.mxu0 0
        %1494 = vmatpush2.bf16.msra.mxu0 0
        %1495 = vmatprep.mubr.bf16.mxu0 0
        %1496 = vmatmul.mubr.bf16.gmra.mxu0 %v1229
        %v1497 = vpop.f32.mrf.mxu0
        %v1498 = vadd.f32 %v1457, %v1497
        %v1499 = vpop.f32.mrf.mxu0
        %v1500 = vpop.f32.mrf.mxu0
        %v1501 = vadd.f32 %v1460, %v1500
        %v1502 = vpop.f32.mrf.mxu0
        %1503 = vdwg.mxu0
        %v1504 = vld [vmem:[#allocation7 + $0x4] sm:$0x1]
        %v1505 = vlaneseq
        %v1506 = vshrl.u32 %v1505, 7
        %v1507 = vsub.s32 0, %v1506
        %v1508 = vrot.slane %v1504, %v1507
        %v1509 = vmul.f32 %v1498, %v1508
        %v1510 = vmul.f32 %v1501, %v1508
        %v1511 = vld [vmem:[#allocation7 + $0x5] sm:$0x1]
        %v1512 = vlaneseq
        %v1513 = vshrl.u32 %v1512, 7
        %v1514 = vsub.s32 0, %v1513
        %v1515 = vrot.slane %v1511, %v1514
        %v1516 = vadd.f32 %v1509, %v1515
        %v1517 = vadd.f32 %v1510, %v1515
        %v1518 = vmax.f32 %v1516, 0.0
        %v1519 = vmax.f32 %v1517, 0.0
        %v1520 = vadd.f32 %v1518, %v1519
        %v1521 = vrot.slane %v1520, 4
        %v1522 = vadd.f32 %v1520, %v1521
        %v1523 = vrot.slane %v1522, 2
        %v1524 = vadd.f32 %v1522, %v1523
        %v1525 = vrot.slane %v1524, 1
        %v1526 = vadd.f32 %v1524, %v1525
        %v1527 = vrcp.pop 16.0
        %v1528 = vmul.f32 %v1526, %v1527
        %v1529 = vld [vmem:[#allocation8] sm:$0xff]
        %v1530 = vld [vmem:[#allocation8 + $0x8] sm:$0xff]
        %v1531 = vld [vmem:[#allocation8 + $0x10] sm:$0xff]
        %v1532 = vld [vmem:[#allocation8 + $0x18] sm:$0xff]
        %v1533 = vld [vmem:[#allocation8 + $0x20] sm:$0xff]
        %v1534 = vld [vmem:[#allocation8 + $0x28] sm:$0xff]
        %v1535 = vld [vmem:[#allocation8 + $0x30] sm:$0xff]
        %v1536 = vld [vmem:[#allocation8 + $0x38] sm:$0xff]
        %v1537 = vld [vmem:[#allocation8 + $0x40] sm:$0xff]
        %v1538 = vld [vmem:[#allocation8 + $0x48] sm:$0xff]
        %v1539 = vld [vmem:[#allocation8 + $0x50] sm:$0xff]
        %v1540 = vld [vmem:[#allocation8 + $0x58] sm:$0xff]
        %v1541 = vld [vmem:[#allocation8 + $0x60] sm:$0xff]
        %v1542 = vld [vmem:[#allocation8 + $0x68] sm:$0xff]
        %v1543 = vld [vmem:[#allocation8 + $0x70] sm:$0xff]
        %v1544 = vld [vmem:[#allocation8 + $0x78] sm:$0xff]
        %1545 = vmatprep.subr.mxu0 0.0
        %1546 = vmatpush1.msra.mxu0 %v1544
        %1547 = vmatprep.subr.mxu0 0.0
        %1548 = vmatpush1.msra.mxu0 %v1543
        %1549 = vmatprep.subr.mxu0 0.0
        %1550 = vmatpush1.msra.mxu0 %v1542
        %1551 = vmatprep.subr.mxu0 0.0
        %1552 = vmatpush1.msra.mxu0 %v1541
        %1553 = vmatprep.subr.mxu0 0.0
        %1554 = vmatpush1.msra.mxu0 %v1540
        %1555 = vmatprep.subr.mxu0 0.0
        %1556 = vmatpush1.msra.mxu0 %v1539
        %1557 = vmatprep.subr.mxu0 0.0
        %1558 = vmatpush1.msra.mxu0 %v1538
        %1559 = vmatprep.subr.mxu0 0.0
        %1560 = vmatpush1.msra.mxu0 %v1537
        %1561 = vmatprep.subr.mxu0 0.0
        %1562 = vmatpush1.msra.mxu0 %v1536
        %1563 = vmatprep.subr.mxu0 0.0
        %1564 = vmatpush1.msra.mxu0 %v1535
        %1565 = vmatprep.subr.mxu0 0.0
        %1566 = vmatpush1.msra.mxu0 %v1534
        %1567 = vmatprep.subr.mxu0 0.0
        %1568 = vmatpush1.msra.mxu0 %v1533
        %1569 = vmatprep.subr.mxu0 0.0
        %1570 = vmatpush1.msra.mxu0 %v1532
        %1571 = vmatprep.subr.mxu0 0.0
        %1572 = vmatpush1.msra.mxu0 %v1531
        %1573 = vmatprep.subr.mxu0 0.0
        %1574 = vmatpush1.msra.mxu0 %v1530
        %1575 = vmatprep.subr.mxu0 0.0
        %1576 = vmatpush1.msra.mxu0 %v1529
        %1577 = vmatprep.subr.mxu0 0.0
        %1578 = vmatpush2.msra.mxu0 0.0
        %1579 = vmatprep.subr.mxu0 0.0
        %1580 = vmatpush2.msra.mxu0 0.0
        %1581 = vmatprep.subr.mxu0 0.0
        %1582 = vmatpush2.msra.mxu0 0.0
        %1583 = vmatprep.subr.mxu0 0.0
        %1584 = vmatpush2.msra.mxu0 0.0
        %1585 = vmatprep.subr.mxu0 0.0
        %1586 = vmatpush2.msra.mxu0 0.0
        %1587 = vmatprep.subr.mxu0 0.0
        %1588 = vmatpush2.msra.mxu0 0.0
        %1589 = vmatprep.subr.mxu0 0.0
        %1590 = vmatpush2.msra.mxu0 0.0
        %1591 = vmatprep.subr.mxu0 0.0
        %1592 = vmatpush2.msra.mxu0 0.0
        %1593 = vmatprep.subr.mxu0 0.0
        %1594 = vmatpush2.msra.mxu0 0.0
        %1595 = vmatprep.subr.mxu0 0.0
        %1596 = vmatpush2.msra.mxu0 0.0
        %1597 = vmatprep.subr.mxu0 0.0
        %1598 = vmatpush2.msra.mxu0 0.0
        %1599 = vmatprep.subr.mxu0 0.0
        %1600 = vmatpush2.msra.mxu0 0.0
        %1601 = vmatprep.subr.mxu0 0.0
        %1602 = vmatpush2.msra.mxu0 0.0
        %1603 = vmatprep.subr.mxu0 0.0
        %1604 = vmatpush2.msra.mxu0 0.0
        %1605 = vmatprep.subr.mxu0 0.0
        %1606 = vmatpush2.msra.mxu0 0.0
        %1607 = vmatprep.subr.mxu0 0.0
        %1608 = vmatpush2.msra.mxu0 0.0
        %1609 = vmatprep.mubr.f32.mxu0 0.0
        %1610 = vmatmul.mubr.f32.gmra.mxu0 %v1528
        %v1611 = vpop.f32.mrf.mxu0
        %v1612 = vadd.f32 0.0, %v1611
        %v1613 = vpop.f32.mrf.mxu0
        %1614 = vdwg.mxu0
        %v1615 = vlaneseq
        %v1616 = vand.u32 %v1615, 127
        %vm1617 = vcmp.lt.s32.totalorder %v1616, 6
        %v1618 = vsel %vm1617, %v1612, -1e+30
        %v1619 = vsel %vm1202, %v1618, -inf
        %1620 = vmax.xlane.f32.xlu0 %v1619
        %v1621 = vpop.xlane.xlu0 %1620
        %v1622 = vsub.f32 %v1618, %v1621
        %v1623 = vmul.f32 %v1622, 1.442695
        %v1624 = vpow.pop %v1623
        %v1625 = vsel %vm1202, %v1624, 0.0
        %1626 = vadd.xlane.f32.xlu0 %v1625
        %v1627 = vpop.xlane.xlu0 %1626
        %v1628 = vlog2.pop %v1627
        %v1629 = vmul.f32 %v1628, 0.6931472
        %v1630 = vadd.f32 %v1629, %v1621
        %v1631 = vsub.f32 %v1618, %v1630
        %vm1632 = vcmask 40960
        %1633 = vst.msk [vmem:[%s284] sm:$0x1] %vm1632, %v1631
        %v1634 = vpack.c.bf16 %v1519, %v1518
        %v1635 = vld [vmem:[#allocation8] sm:$0xff]
        %v1636 = vld [vmem:[#allocation8 + $0x8] sm:$0xff]
        %v1637 = vld [vmem:[#allocation8 + $0x10] sm:$0xff]
        %v1638 = vld [vmem:[#allocation8 + $0x18] sm:$0xff]
        %v1639 = vld [vmem:[#allocation8 + $0x20] sm:$0xff]
        %v1640 = vld [vmem:[#allocation8 + $0x28] sm:$0xff]
        %v1641 = vld [vmem:[#allocation8 + $0x30] sm:$0xff]
        %v1642 = vld [vmem:[#allocation8 + $0x38] sm:$0xff]
        %v1643 = vld [vmem:[#allocation8 + $0x40] sm:$0xff]
        %v1644 = vld [vmem:[#allocation8 + $0x48] sm:$0xff]
        %v1645 = vld [vmem:[#allocation8 + $0x50] sm:$0xff]
        %v1646 = vld [vmem:[#allocation8 + $0x58] sm:$0xff]
        %v1647 = vld [vmem:[#allocation8 + $0x60] sm:$0xff]
        %v1648 = vld [vmem:[#allocation8 + $0x68] sm:$0xff]
        %v1649 = vld [vmem:[#allocation8 + $0x70] sm:$0xff]
        %v1650 = vld [vmem:[#allocation8 + $0x78] sm:$0xff]
        %v1651 = vpack.c.bf16 %v1636, %v1635
        %v1652 = vpack.c.bf16 %v1638, %v1637
        %v1653 = vpack.c.bf16 %v1640, %v1639
        %v1654 = vpack.c.bf16 %v1642, %v1641
        %v1655 = vpack.c.bf16 %v1644, %v1643
        %v1656 = vpack.c.bf16 %v1646, %v1645
        %v1657 = vpack.c.bf16 %v1648, %v1647
        %v1658 = vpack.c.bf16 %v1650, %v1649
        %1659 = vmatprep.subr.bf16.mxu0 0
        %1660 = vmatpush1.bf16.msra.mxu0 %v1658
        %1661 = vmatprep.subr.bf16.mxu0 0
        %1662 = vmatpush1.bf16.msra.mxu0 %v1657
        %1663 = vmatprep.subr.bf16.mxu0 0
        %1664 = vmatpush1.bf16.msra.mxu0 %v1656
        %1665 = vmatprep.subr.bf16.mxu0 0
        %1666 = vmatpush1.bf16.msra.mxu0 %v1655
        %1667 = vmatprep.subr.bf16.mxu0 0
        %1668 = vmatpush1.bf16.msra.mxu0 %v1654
        %1669 = vmatprep.subr.bf16.mxu0 0
        %1670 = vmatpush1.bf16.msra.mxu0 %v1653
        %1671 = vmatprep.subr.bf16.mxu0 0
        %1672 = vmatpush1.bf16.msra.mxu0 %v1652
        %1673 = vmatprep.subr.bf16.mxu0 0
        %1674 = vmatpush1.bf16.msra.mxu0 %v1651
        %1675 = vmatprep.subr.bf16.mxu0 0
        %1676 = vmatpush2.bf16.msra.mxu0 0
        %1677 = vmatprep.subr.bf16.mxu0 0
        %1678 = vmatpush2.bf16.msra.mxu0 0
        %1679 = vmatprep.subr.bf16.mxu0 0
        %1680 = vmatpush2.bf16.msra.mxu0 0
        %1681 = vmatprep.subr.bf16.mxu0 0
        %1682 = vmatpush2.bf16.msra.mxu0 0
        %1683 = vmatprep.subr.bf16.mxu0 0
        %1684 = vmatpush2.bf16.msra.mxu0 0
        %1685 = vmatprep.subr.bf16.mxu0 0
        %1686 = vmatpush2.bf16.msra.mxu0 0
        %1687 = vmatprep.subr.bf16.mxu0 0
        %1688 = vmatpush2.bf16.msra.mxu0 0
        %1689 = vmatprep.subr.bf16.mxu0 0
        %1690 = vmatpush2.bf16.msra.mxu0 0
        %1691 = vmatprep.mubr.bf16.mxu0 0
        %1692 = vmatmul.mubr.bf16.gmra.mxu0 %v1634
        %v1693 = vpop.f32.mrf.mxu0
        %v1694 = vadd.f32 0.0, %v1693
        %v1695 = vpop.f32.mrf.mxu0
        %v1696 = vpop.f32.mrf.mxu0
        %v1697 = vadd.f32 0.0, %v1696
        %v1698 = vpop.f32.mrf.mxu0
        %1699 = vdwg.mxu0
        %vm1700 = vcmask 48128
        %1701 = vst.msk [vmem:[%s296] sm:$0xff] %vm1700, %v1694
        %1702 = vst.msk [vmem:[%s296 + $0x8] sm:$0xff] %vm1700, %v1697
        %s1703 = sand.u32 %s122, 1
        %s1704 = scalar_lea.sflag [#allocation4], %s1703
        %s1705 = sand.u32 %s122, 1
        %s1706 = scalar_lea.vmem [#allocation10], %s1705
        %p1707 = scmp.lt.s32.totalorder %s25, 1
        %s1708 = scalar_select %p1707, %s25, 1
        %s1709 = smul.addr %s1708, 2
        %s1710 = smul.addr %s1709, 8
        %s1711 = scalar_lea.vmem %s5, %s1710
        // Predicated region
        $region53: #{tpu_custom_call.1} parent=35 // pred_check
          %p1712 = pneg %p132
        $region54: #{tpu_custom_call.1} parent=35 // pred_check_branch
          %1714 = sbr.rel (%p1712) target = $region56
        $region55: #{tpu_custom_call.1} parent=35 // pred_region
          %s1716 = ssub.s32 16, 16
          %1717 = vsyncadd %s1704, %s1716
          %s1718 = smul.addr %s25, 16
          %s1719 = scalar_lea.hbm %s4, %s1718
          %s1721 = sshll.u32 %s1706, 4
          %s1722 = int_to_ptr.vmem [resolvable:$true] %s1721
          %1724 = dma.vmem_to_hbm [thread:$0]  %s1722, 16, %s1719, %s1704
        $region56: #{tpu_custom_call.1} parent=35 // pred_fallthru
          _
        // Predicated region
        $region57: #{tpu_custom_call.1} parent=35 // pred_check
          %p1725 = pneg %p158
        $region58: #{tpu_custom_call.1} parent=35 // pred_check_branch
          %1727 = sbr.rel (%p1725) target = $region60
        $region59: #{tpu_custom_call.1} parent=35 // pred_region
          _
        $region60: #{tpu_custom_call.1} parent=35 // pred_fallthru
          _
      $region36: #{tpu_custom_call.1} parent=5 // pred_fallthru
        _
      %p1728 = scmp.le.s32.totalorder 2, %s20
      // Predicated region
      $region61: #{tpu_custom_call.1} parent=5 // pred_check
        %p1729 = pneg %p1728
      $region62: #{tpu_custom_call.1} parent=5 // pred_check_branch
        %1731 = sbr.rel (%p1729) target = $region64
      $region63: #{tpu_custom_call.1} parent=5 // pred_region
        %s1732 = ssub.s32 %s20, 2
        // Predicated region
        $region65: #{tpu_custom_call.1} parent=63 // pred_check
          %p1733 = pneg %p138
        $region66: #{tpu_custom_call.1} parent=63 // pred_check_branch
          %1735 = sbr.rel (%p1733) target = $region68
        $region67: #{tpu_custom_call.1} parent=63 // pred_region
          %s1736 = sand.u32 %s123, 1
          %s1737 = scalar_lea.sflag [#allocation4], %s1736
          %s1738 = sand.u32 %s123, 1
          %s1739 = scalar_lea.vmem [#allocation10], %s1738
          %1740 = dma.done %s1737, 16
        $region68: #{tpu_custom_call.1} parent=63 // pred_fallthru
          _
        // Predicated region
        $region69: #{tpu_custom_call.1} parent=63 // pred_check
          %p1741 = pneg %p164
        $region70: #{tpu_custom_call.1} parent=63 // pred_check_branch
          %1743 = sbr.rel (%p1741) target = $region72
        $region71: #{tpu_custom_call.1} parent=63 // pred_region
          %p1744 = scmp.lt.s32.totalorder %s26, 1
          %s1745 = scalar_select %p1744, %s26, 1
          %s1746 = smul.addr %s1745, 2
          %s1747 = smul.addr %s1746, 8
          %s1748 = scalar_lea.vmem %s5, %s1747
        $region72: #{tpu_custom_call.1} parent=63 // pred_fallthru
          _
      $region64: #{tpu_custom_call.1} parent=5 // pred_fallthru
        _
    $region6: #{tpu_custom_call.1} parent=1 // loop_footer
      %s24 = sadd.s32 1, %s20
    $region7: #{tpu_custom_call.1} parent=1 // loop_footer_branch
      %19 = sbr.rel target = $region3
    $region8: #{tpu_custom_call.1} parent=1 // loop_exit
      _
    %1749 = vsyncpa [#allocation3], 1
    %s1750 = scalar_lea.sflag [#allocation3], 1
    %1751 = vsyncpa %s1750, 1
    %1752 = vsyncpa [#allocation6], 1
    %1753 = vsyncpa [#allocation9], 1
    %1754 = vsyncpa [#allocation4], 1
    %s1755 = scalar_lea.sflag [#allocation4], 1
    %1756 = vsyncpa %s1755, 1

</llo_original>
